<compile_context>
chip_gen: v7x
topology: tpu7x:2x2x1
jax: 0.10.0
libtpu: 0.0.40
codegen_flags: <defaults>
</compile_context>

<pallas_src>
import functools

import jax
import jax.numpy as jnp
from jax.experimental import pallas as pl
from jax.experimental.pallas import tpu as pltpu


def _choose_tiles(n, *, max_row_tile=512, max_red_tile=1024):
    """Pick row tile (tm) and reduction tile (tk).

    Every block dim is either a multiple of 128 or the full array extent (Mosaic's
    (8, 128) rule).  tm is capped near n/2 so the megacore-parallel row axis feeds both
    v7x TensorCores; tk is kept large so MXU/DMA see big blocks and per-step overhead
    (~0.35 us) is amortized.  Ragged last tiles are handled in-kernel (no W padding).
    """
    if n < 256 and n % 128 != 0:
        return n, n                       # one full-extent block: no padding, no masking
    tk = min(max_red_tile, max(128, (n // 128) * 128))
    tm = min(max_row_tile, max(128, ((n // 2) // 128) * 128))
    return tm, tk


def _mask_cols(w, k, n_valid):
    """Zero columns of a (tm, tk) W block whose global column index is >= n_valid."""
    tk = w.shape[1]
    col = jax.lax.broadcasted_iota(jnp.int32, (1, tk), 1) + k * tk
    return jnp.where(col < n_valid, w, jnp.zeros_like(w))


def _mask_rows(w, k, n_valid):
    """Zero rows of a (tk, tm) W block whose global row index is >= n_valid."""
    tk = w.shape[0]
    row = jax.lax.broadcasted_iota(jnp.int32, (tk, 1), 0) + k * tk
    return jnp.where(row < n_valid, w, jnp.zeros_like(w))


def _l21_sym_kernel(w_ref, y_k_ref, y_i_ref, grads_ref, acc_ref, csum_ref,
                    *, beta, n_valid, ragged_k):
    """Symmetric-W fast path. Grid = (row tiles, reduction tiles); W streamed once."""
    k = pl.program_id(1)
    nk = pl.num_programs(1)

    @pl.when(k == 0)
    def _init():
        acc_ref[...] = jnp.zeros_like(acc_ref)
        csum_ref[...] = jnp.zeros_like(csum_ref)

    w = w_ref[...]                                            # (tm, tk), bf16
    if ragged_k:                                              # static flag: last k tile ragged
        w = _mask_cols(w, k, n_valid)

    # Symmetric W: colsum == rowsum -> lane-reduce the same block (VPU/XLU slots are free
    # in this HBM-bound kernel); accumulate in f32.
    csum_ref[...] += jnp.sum(w.astype(jnp.float32), axis=1, keepdims=True)
    # W @ Y on the MXU: bf16 operands, f32 accumulation into VMEM scratch.
    acc_ref[...] += jnp.dot(w, y_k_ref[...], preferred_element_type=jnp.float32)

    @pl.when(k == nk - 1)
    def _finalize():
        y_i = y_i_ref[...]                                    # (tm, K), f32
        rownorm = jnp.sqrt(jnp.sum(y_i * y_i, axis=1, keepdims=True))
        grads_ref[...] = (
            (2.0 * csum_ref[...] + jnp.float32(beta) * rownorm) * y_i
            - 2.0 * acc_ref[...]                              # W@Y + W.T@Y == 2 * W@Y
        ).astype(grads_ref.dtype)


def _l21_gen_kernel(w_row_ref, w_col_ref, y_k_ref, y_i_ref, grads_ref, acc_ref, csum_ref,
                    *, beta, n_valid, ragged_k):
    """General-W path: streams W[i_tile, k_tile] and W[k_tile, i_tile]; colsum fused."""
    k = pl.program_id(1)
    nk = pl.num_programs(1)

    @pl.when(k == 0)
    def _init():
        acc_ref[...] = jnp.zeros_like(acc_ref)
        csum_ref[...] = jnp.zeros_like(csum_ref)

    y_k = y_k_ref[...]                                        # (tk, K), bf16
    w_row = w_row_ref[...]                                    # (tm, tk) = W[i_tile, k_tile]
    w_col = w_col_ref[...]                                    # (tk, tm) = W[k_tile, i_tile]
    if ragged_k:
        w_row = _mask_cols(w_row, k, n_valid)
        w_col = _mask_rows(w_col, k, n_valid)

    # colsum(W)[i_tile]: contract the transposed tile with a ones vector on the MXU; the
    # result lands directly in (tm, 1) sublane orientation (no transpose / extra W pass).
    ones = jnp.ones((w_col.shape[0], 1), dtype=w_col.dtype)
    csum_ref[...] += jax.lax.dot_general(
        w_col, ones, dimension_numbers=(((0,), (0,)), ((), ())),
        preferred_element_type=jnp.float32)

    # Two separate accumulations: each MXU result streams straight into the VMEM
    # accumulator (lower vreg pressure; MRB in-place accumulate on v7x).
    acc_ref[...] += jnp.dot(w_row, y_k, preferred_element_type=jnp.float32)
    # Dim-0 contraction == transposed-LHS matmul; no explicit transpose of the block.
    acc_ref[...] += jax.lax.dot_general(
        w_col, y_k, dimension_numbers=(((0,), (0,)), ((), ())),
        preferred_element_type=jnp.float32)

    @pl.when(k == nk - 1)
    def _finalize():
        y_i = y_i_ref[...]                                    # (tm, K), f32
        rownorm = jnp.sqrt(jnp.sum(y_i * y_i, axis=1, keepdims=True))
        grads_ref[...] = (
            (2.0 * csum_ref[...] + jnp.float32(beta) * rownorm) * y_i - acc_ref[...]
        ).astype(grads_ref.dtype)


def l21_loss_v2(Y, W, *, beta=1.0, symmetric=False, w_compute_dtype=jnp.bfloat16,
                max_row_tile=512, max_red_tile=1024):
    """Returns (loss, grads) matching L21LossV2.forward(Y, W) (f32 instead of f64)."""
    N, K = Y.shape
    assert W.shape == (N, N)

    Yf = Y.astype(jnp.float32)
    # NOTE: if W / Y are reused across many calls, hoist these casts (store W in bf16).
    Wc = W.astype(w_compute_dtype)
    Yk = Y.astype(w_compute_dtype)

    tm, tk = _choose_tiles(N, max_row_tile=max_row_tile, max_red_tile=max_red_tile)
    ni, nk = pl.cdiv(N, tm), pl.cdiv(N, tk)
    n_out = ni * tm
    n_pad = max(n_out, nk * tk)
    if n_pad != N:
        # Zero-padding Y is O(N*K) and exact; W itself is NOT padded (no N^2 copy) --
        # its ragged last tile is zero-masked inside the kernel.
        Yf = jnp.pad(Yf, ((0, n_pad - N), (0, 0)))
        Yk = jnp.pad(Yk, ((0, n_pad - N), (0, 0)))
    ragged_k = (N % tk) != 0

    y_k_spec = pl.BlockSpec((tk, K), lambda i, k: (k, 0))     # streamed reduction operand
    y_i_spec = pl.BlockSpec((tm, K), lambda i, k: (i, 0))     # f32 operand for finalize
    out_spec = pl.BlockSpec((tm, K), lambda i, k: (i, 0))     # lane-dense grads tile
    scratch = [pltpu.VMEM((tm, K), jnp.float32),              # (W [+ W.T]) @ Y accumulator
               pltpu.VMEM((tm, 1), jnp.float32)]              # colsum(W) accumulator

    if symmetric:
        kernel = functools.partial(_l21_sym_kernel, beta=float(beta),
                                   n_valid=N, ragged_k=ragged_k)
        in_specs = [pl.BlockSpec((tm, tk), lambda i, k: (i, k)), y_k_spec, y_i_spec]
        operands = (Wc, Yk, Yf)
    else:
        kernel = functools.partial(_l21_gen_kernel, beta=float(beta),
                                   n_valid=N, ragged_k=ragged_k)
        in_specs = [pl.BlockSpec((tm, tk), lambda i, k: (i, k)),   # W[i_tile, k_tile]
                    pl.BlockSpec((tk, tm), lambda i, k: (k, i)),   # W[k_tile, i_tile]
                    y_k_spec, y_i_spec]
        operands = (Wc, Wc, Yk, Yf)

    grads = pl.pallas_call(
        kernel,
        out_shape=jax.ShapeDtypeStruct((n_out, K), jnp.float32),
        grid_spec=pltpu.PrefetchScalarGridSpec(
            num_scalar_prefetch=0,
            grid=(ni, nk),                                    # reduction axis last
            in_specs=in_specs,
            out_specs=out_spec,
            scratch_shapes=scratch,
        ),
        compiler_params=pltpu.CompilerParams(
            dimension_semantics=("parallel", "arbitrary"),    # row tiles megacore-parallel
        ),
    )(*operands)

    grads = grads[:N]
    # TODO(synk): |sum(grads)| in f32; a compensated/pairwise sum would track the f64
    # reference more tightly under heavy cancellation for very large N.
    loss = jnp.abs(jnp.sum(grads, dtype=jnp.float32))
    return loss, grads


def _reference(Y, W, beta=1.0):
    """Pure-JAX f32 reference for L21LossV2.forward."""
    N = W.shape[0]
    Wz = W * (1.0 - jnp.eye(N, dtype=W.dtype))
    deg = jnp.sum(Wz, axis=0)
    L = jnp.diag(deg) - Wz
    YLY = L @ Y + L.T @ Y
    DY = beta * jnp.linalg.norm(Y, axis=1, keepdims=True) * Y
    grads = YLY + DY
    return jnp.abs(jnp.sum(grads)), grads


def _check(name, loss, grads, ref_loss, ref_grads):
    assert grads.shape == ref_grads.shape, (name, grads.shape, ref_grads.shape)
    scale = float(jnp.max(jnp.abs(ref_grads)))
    max_err = float(jnp.max(jnp.abs(grads - ref_grads)))
    assert max_err <= 5e-3 * scale + 1e-3, (name, max_err, scale)
    loss_scale = float(jnp.sum(jnp.abs(ref_grads)))
    assert abs(float(loss) - float(ref_loss)) <= 1e-4 * loss_scale + 1e-2, (
        name, float(loss), float(ref_loss))


if __name__ == "__main__":
    key = jax.random.PRNGKey(0)
    k1, k2, k3, k4 = jax.random.split(key, 4)

    # Case 1: symmetric adjacency (typical graph-Laplacian use) -> single-W-read fast path.
    # max_red_tile=256 forces a (2, 2) grid so the k-accumulation path is exercised.
    N1, K1 = 512, 128
    A = jax.random.uniform(k1, (N1, N1), dtype=jnp.float32)
    W1 = 0.5 * (A + A.T)
    Y1 = jax.random.normal(k2, (N1, K1), dtype=jnp.float32)
    loss1, grads1 = l21_loss_v2(Y1, W1, beta=1.0, symmetric=True, max_red_tile=256)
    jax.block_until_ready((loss1, grads1))
    ref_loss1, ref_grads1 = _reference(Y1, W1, beta=1.0)
    _check("symmetric", loss1, grads1, ref_loss1, ref_grads1)

    # Case 2: general (non-symmetric) W with a ragged size -> two-operand path,
    # ragged row/column tiles masked in-kernel, no padded W copy.
    N2, K2 = 700, 128
    W2 = jax.random.uniform(k3, (N2, N2), dtype=jnp.float32)
    Y2 = jax.random.normal(k4, (N2, K2), dtype=jnp.float32)
    loss2, grads2 = l21_loss_v2(Y2, W2, beta=0.5, symmetric=False)
    jax.block_until_ready((loss2, grads2))
    ref_loss2, ref_grads2 = _reference(Y2, W2, beta=0.5)
    _check("general", loss2, grads2, ref_loss2, ref_grads2)

    print("KERNEL_OK")
</pallas_src>

<mosaic_0001>
module attributes {stable_mosaic.version = 11 : i64} {
  func.func @_l21_sym_kernel(%arg0: i32, %arg1: i32, %arg2: memref<256x256xbf16, #tpu.memory_space<vmem>>, %arg3: memref<256x128xbf16, #tpu.memory_space<vmem>>, %arg4: memref<256x128xf32, #tpu.memory_space<vmem>>, %arg5: memref<256x128xf32, #tpu.memory_space<vmem>>, %arg6: memref<256x128xf32, #tpu.memory_space<vmem>>, %arg7: memref<256x1xf32, #tpu.memory_space<vmem>>) attributes {dimension_semantics = [#tpu.dimension_semantics<parallel>, #tpu.dimension_semantics<arbitrary>], iteration_bounds = array<i64: 2, 2>, scalar_prefetch = 0 : i64, scratch_operands = 2 : i64, tpu.core_type = #tpu.core_type<tc>, window_params = [{transform_indices = @transform_0, window_bounds = array<i64: 256, 256>}, {transform_indices = @transform_1, window_bounds = array<i64: 256, 128>}, {transform_indices = @transform_2, window_bounds = array<i64: 256, 128>}, {transform_indices = @transform_3, window_bounds = array<i64: 256, 128>}]} {
    %c0_i32 = arith.constant 0 : i32
    %0 = arith.cmpi eq, %arg1, %c0_i32 : i32
    %1 = arith.extui %0 : i1 to i32
    %c0_i32_0 = arith.constant 0 : i32
    %2 = arith.cmpi ne, %1, %c0_i32_0 : i32
    scf.if %2 {
      %cst_14 = arith.constant 0.000000e+00 : f32
      %18 = vector.broadcast %cst_14 : f32 to vector<256x128xf32>
      %c0_15 = arith.constant 0 : index
      %c0_16 = arith.constant 0 : index
      %19 = vector.load %arg6[%c0_15, %c0_16] : memref<256x128xf32, #tpu.memory_space<vmem>>, vector<256x128xf32>
      tpu.vector_store %arg6[%c0_15, %c0_16], %18 {strides = array<i32>} : memref<256x128xf32, #tpu.memory_space<vmem>>, vector<256x128xf32>,
      %cst_17 = arith.constant 0.000000e+00 : f32
      %20 = vector.broadcast %cst_17 : f32 to vector<256x1xf32>
      %c0_18 = arith.constant 0 : index
      %c0_19 = arith.constant 0 : index
      %21 = vector.load %arg7[%c0_18, %c0_19] : memref<256x1xf32, #tpu.memory_space<vmem>>, vector<256x1xf32>
      tpu.vector_store %arg7[%c0_18, %c0_19], %20 {strides = array<i32>} : memref<256x1xf32, #tpu.memory_space<vmem>>, vector<256x1xf32>,
    } else {
    }
    %c0 = arith.constant 0 : index
    %c0_1 = arith.constant 0 : index
    %3 = vector.load %arg2[%c0, %c0_1] : memref<256x256xbf16, #tpu.memory_space<vmem>>, vector<256x256xbf16>
    %c0_2 = arith.constant 0 : index
    %c0_3 = arith.constant 0 : index
    %4 = vector.load %arg7[%c0_2, %c0_3] : memref<256x1xf32, #tpu.memory_space<vmem>>, vector<256x1xf32>
    %5 = arith.extf %3 : vector<256x256xbf16> to vector<256x256xf32>
    %cst = arith.constant dense<0.000000e+00> : vector<256xf32>
    %6 = vector.multi_reduction <add>, %5, %cst [1] : vector<256x256xf32> to vector<256xf32>
    %7 = vector.shape_cast %6 : vector<256xf32> to vector<256x1xf32>
    %8 = arith.addf %4, %7 : vector<256x1xf32>
    %c0_4 = arith.constant 0 : index
    %c0_5 = arith.constant 0 : index
    %9 = vector.load %arg7[%c0_4, %c0_5] : memref<256x1xf32, #tpu.memory_space<vmem>>, vector<256x1xf32>
    tpu.vector_store %arg7[%c0_4, %c0_5], %8 {strides = array<i32>} : memref<256x1xf32, #tpu.memory_space<vmem>>, vector<256x1xf32>,
    %c0_6 = arith.constant 0 : index
    %c0_7 = arith.constant 0 : index
    %10 = vector.load %arg6[%c0_6, %c0_7] : memref<256x128xf32, #tpu.memory_space<vmem>>, vector<256x128xf32>
    %c0_8 = arith.constant 0 : index
    %c0_9 = arith.constant 0 : index
    %11 = vector.load %arg3[%c0_8, %c0_9] : memref<256x128xbf16, #tpu.memory_space<vmem>>, vector<256x128xbf16>
    %cst_10 = arith.constant dense<0.000000e+00> : vector<256x128xf32>
    %12 = tpu.matmul %3, %11, %cst_10 {dimension_numbers = #tpu.dot_dimension_numbers<[1], [0], [0], [1], [0, 0, 1, 1], [], []>} : vector<256x256xbf16>, vector<256x128xbf16>, vector<256x128xf32> -> vector<256x128xf32>
    %13 = arith.addf %10, %12 : vector<256x128xf32>
    %c0_11 = arith.constant 0 : index
    %c0_12 = arith.constant 0 : index
    %14 = vector.load %arg6[%c0_11, %c0_12] : memref<256x128xf32, #tpu.memory_space<vmem>>, vector<256x128xf32>
    tpu.vector_store %arg6[%c0_11, %c0_12], %13 {strides = array<i32>} : memref<256x128xf32, #tpu.memory_space<vmem>>, vector<256x128xf32>,
    %c1_i32 = arith.constant 1 : i32
    %15 = arith.cmpi eq, %arg1, %c1_i32 : i32
    %16 = arith.extui %15 : i1 to i32
    %c0_i32_13 = arith.constant 0 : i32
    %17 = arith.cmpi ne, %16, %c0_i32_13 : i32
    scf.if %17 {
      %c0_14 = arith.constant 0 : index
      %c0_15 = arith.constant 0 : index
      %18 = vector.load %arg4[%c0_14, %c0_15] : memref<256x128xf32, #tpu.memory_space<vmem>>, vector<256x128xf32>
      %19 = arith.mulf %18, %18 : vector<256x128xf32>
      %cst_16 = arith.constant dense<0.000000e+00> : vector<256xf32>
      %20 = vector.multi_reduction <add>, %19, %cst_16 [1] : vector<256x128xf32> to vector<256xf32>
      %21 = vector.shape_cast %20 : vector<256xf32> to vector<256x1xf32>
      %22 = math.sqrt %21 : vector<256x1xf32>
      %c0_17 = arith.constant 0 : index
      %c0_18 = arith.constant 0 : index
      %23 = vector.load %arg7[%c0_17, %c0_18] : memref<256x1xf32, #tpu.memory_space<vmem>>, vector<256x1xf32>
      %cst_19 = arith.constant 2.000000e+00 : f32
      %24 = vector.broadcast %cst_19 : f32 to vector<256x1xf32>
      %25 = arith.mulf %24, %23 : vector<256x1xf32>
      %cst_20 = arith.constant 1.000000e+00 : f32
      %26 = vector.broadcast %cst_20 : f32 to vector<256x1xf32>
      %27 = arith.mulf %26, %22 : vector<256x1xf32>
      %28 = arith.addf %25, %27 : vector<256x1xf32>
      %29 = vector.broadcast %28 : vector<256x1xf32> to vector<256x128xf32>
      %30 = arith.mulf %29, %18 : vector<256x128xf32>
      %c0_21 = arith.constant 0 : index
      %c0_22 = arith.constant 0 : index
      %31 = vector.load %arg6[%c0_21, %c0_22] : memref<256x128xf32, #tpu.memory_space<vmem>>, vector<256x128xf32>
      %cst_23 = arith.constant 2.000000e+00 : f32
      %32 = vector.broadcast %cst_23 : f32 to vector<256x128xf32>
      %33 = arith.mulf %32, %31 : vector<256x128xf32>
      %34 = arith.subf %30, %33 : vector<256x128xf32>
      %c0_24 = arith.constant 0 : index
      %c0_25 = arith.constant 0 : index
      %35 = vector.load %arg5[%c0_24, %c0_25] : memref<256x128xf32, #tpu.memory_space<vmem>>, vector<256x128xf32>
      tpu.vector_store %arg5[%c0_24, %c0_25], %34 {strides = array<i32>} : memref<256x128xf32, #tpu.memory_space<vmem>>, vector<256x128xf32>,
    } else {
    }
    return
  }
  func.func @transform_0(%arg0: i32, %arg1: i32) -> (i32, i32) {
    %c0_i32 = arith.constant 0 : i32
    return %arg0, %arg1 : i32, i32
  }
  func.func @transform_1(%arg0: i32, %arg1: i32) -> (i32, i32) {
    %c0_i32 = arith.constant 0 : i32
    %c0_i32_0 = arith.constant 0 : i32
    return %arg1, %c0_i32 : i32, i32
  }
  func.func @transform_2(%arg0: i32, %arg1: i32) -> (i32, i32) {
    %c0_i32 = arith.constant 0 : i32
    %c0_i32_0 = arith.constant 0 : i32
    return %arg0, %c0_i32 : i32, i32
  }
  func.func @transform_3(%arg0: i32, %arg1: i32) -> (i32, i32) {
    %c0_i32 = arith.constant 0 : i32
    %c0_i32_0 = arith.constant 0 : i32
    return %arg0, %c0_i32 : i32, i32
  }
}

</mosaic_0001>

<llo_original>
// kernel: tpu_custom_call.1
$region0: #{tpu_custom_call.1}
  #allocation0 [shape = 'u32[]', space=smem, size = 0x4, offset = 0x4, fixed_abs, tag = 'smem constant byte address 0x4 - core index']
  #allocation1 [shape = 'u32[144,128]{1,0:T(1,128)}', space=vmem, size = 0x12000, scoped, tag = 'internal scratch']
  #allocation2 [shape = 'f32[256,128]{1,0:T(8,128)}', space=vmem, size = 0x20000, scoped, tag = 'scratch operand']
  #allocation3 [shape = 'f32[256,1]{1,0:T(8,128)}', space=vmem, size = 0x20000, scoped, tag = 'scratch operand']
  %s0 = inlined_call_operand.hbm [shape: bf16[512,512], index: 0, kind: input, shape index: {}]
  %s1 = inlined_call_operand.hbm [shape: bf16[512,128], index: 1, kind: input, shape index: {}]
  %s2 = inlined_call_operand.hbm [shape: f32[512,128], index: 2, kind: input, shape index: {}]
  %s3 = inlined_call_operand.hbm [shape: f32[512,128], index: 3, kind: output, shape index: {}]
  %s4 = sld [smem:[#allocation0]]
  $region65: #{tpu_custom_call.1} parent=0
    _
  %s6 = ssub.s32 1, %s4
  %s7 = scalar_select 0, %s6, %s4
  $region1: #{tpu_custom_call.1} parent=0
    #allocation4 [shape = 'u8[262144]{0}', space=vmem, size = 0x40000, scoped, tag = 'input window, operand 0']
    #allocation5 [shape = 's32[2]{0}', space=sflag, size = 0x8, scoped, tag = 'scoped memory for tpu_custom_call.1']
    #allocation6 [shape = 's32[2]{0}', space=sflag, size = 0x8, scoped, tag = 'scoped memory for tpu_custom_call.1']
    #allocation7 [shape = 'u8[131072]{0}', space=vmem, size = 0x20000, scoped, tag = 'input window, operand 1']
    #allocation8 [shape = 's32[2]{0}', space=sflag, size = 0x8, scoped, tag = 'scoped memory for tpu_custom_call.1']
    #allocation9 [shape = 'u8[262144]{0}', space=vmem, size = 0x40000, scoped, tag = 'input window, operand 2']
    #allocation10 [shape = 'u8[262144]{0}', space=vmem, size = 0x40000, scoped, tag = 'output window, operand 0']
    %8 = vsyncpa [#allocation5], 0
    %s9 = scalar_lea.sflag [#allocation5], 1
    %10 = vsyncpa %s9, 0
    %11 = vsyncpa [#allocation8], 0
    %s12 = scalar_lea.sflag [#allocation8], 1
    %13 = vsyncpa %s12, 0
    %14 = vsyncpa [#allocation6], 0
    %s15 = scalar_lea.sflag [#allocation6], 1
    %16 = vsyncpa %s15, 0
    loop: start=0, step=1, limit=6
    $region2: #{tpu_custom_call.1} parent=1 // loop_pre_header
      _
    $region3: #{tpu_custom_call.1} parent=1 // loop_header
      %s18 = sphi 0, %s22
      %p19 = scmp.ge.s32.totalorder %s18, 6
      %s25 = sphi 0, %s37
      %s26 = sphi 0, %s33
      %s27 = sphi 0, %s25
      %s28 = sphi 0, %s26
      %s29 = sphi 0, %s27
      %s30 = sphi 0, %s28
      %s42 = sphi 0, %s44
      %s45 = sphi 0, %s42
      %s46 = sphi 0, %s45
      %s62 = sphi 0, %s46
      %s68 = sphi 0, %s70
      %s71 = sphi 0, %s68
      %s72 = sphi 0, %s71
      %s88 = sphi 0, %s72
      %s94 = sphi 0, %s96
      %s97 = sphi 0, %s94
      %s98 = sphi 0, %s97
      %s114 = sphi 0, %s98
      %s120 = sphi 0, %s122
      %s123 = sphi 0, %s120
      %s124 = sphi 0, %s123
      %s140 = sphi 0, %s124
    $region4: #{tpu_custom_call.1} parent=1 // loop_header_branch
      %21 = sbr.rel (%p19) target = $region8
    $region5: #{tpu_custom_call.1} parent=1 // loop_body
      %s23 = ssub.s32 %s18, 1
      %s24 = ssub.s32 %s18, 2
      %s31 = sadd.s32 1, %s26
      %p32 = scmp.ge.s32.totalorder %s31, 2
      %s33 = scalar_select %p32, 0, %s31
      %s34 = sadd.s32 1, %s25
      %s35 = scalar_select %p32, %s34, %s25
      %p36 = scmp.ge.s32.totalorder %s35, 2
      %s37 = scalar_select %p36, 0, %s35
      %s38 = ssub.s32 %s25, %s37
      %s39 = ssub.s32 %s26, %s33
      %s40 = sor.u32 %s38, %s39
      %p41 = scmp.eq.s32.totalorder %s40, 0
      %s43 = sadd.s32 %s42, 1
      %s44 = scalar_select %p41, %s42, %s43
      %p47 = pneg %p41
      %p48 = scmp.eq.s32.totalorder %s18, 3
      %p49 = por %p47, %p48
      %p50 = scmp.ne.s32.totalorder %s42, %s45
      %p51 = scmp.eq.s32.totalorder %s18, 0
      %p52 = por %p50, %p51
      %p53 = scmp.ne.s32.totalorder %s42, %s45
      %p54 = scmp.eq.s32.totalorder %s23, 3
      %p55 = por %p53, %p54
      %p56 = scmp.ne.s32.totalorder %s45, %s46
      %p57 = scmp.eq.s32.totalorder %s23, 0
      %p58 = por %p56, %p57
      %p59 = scmp.ne.s32.totalorder %s45, %s46
      %p60 = scmp.eq.s32.totalorder %s24, 3
      %p61 = por %p59, %p60
      %p63 = scmp.ne.s32.totalorder %s46, %s62
      %p64 = scmp.eq.s32.totalorder %s24, 0
      %p65 = por %p63, %p64
      %s66 = ssub.s32 %s26, %s33
      %p67 = scmp.eq.s32.totalorder %s66, 0
      %s69 = sadd.s32 %s68, 1
      %s70 = scalar_select %p67, %s68, %s69
      %p73 = pneg %p67
      %p74 = scmp.eq.s32.totalorder %s18, 3
      %p75 = por %p73, %p74
      %p76 = scmp.ne.s32.totalorder %s68, %s71
      %p77 = scmp.eq.s32.totalorder %s18, 0
      %p78 = por %p76, %p77
      %p79 = scmp.ne.s32.totalorder %s68, %s71
      %p80 = scmp.eq.s32.totalorder %s23, 3
      %p81 = por %p79, %p80
      %p82 = scmp.ne.s32.totalorder %s71, %s72
      %p83 = scmp.eq.s32.totalorder %s23, 0
      %p84 = por %p82, %p83
      %p85 = scmp.ne.s32.totalorder %s71, %s72
      %p86 = scmp.eq.s32.totalorder %s24, 3
      %p87 = por %p85, %p86
      %p89 = scmp.ne.s32.totalorder %s72, %s88
      %p90 = scmp.eq.s32.totalorder %s24, 0
      %p91 = por %p89, %p90
      %s92 = ssub.s32 %s25, %s37
      %p93 = scmp.eq.s32.totalorder %s92, 0
      %s95 = sadd.s32 %s94, 1
      %s96 = scalar_select %p93, %s94, %s95
      %p99 = pneg %p93
      %p100 = scmp.eq.s32.totalorder %s18, 3
      %p101 = por %p99, %p100
      %p102 = scmp.ne.s32.totalorder %s94, %s97
      %p103 = scmp.eq.s32.totalorder %s18, 0
      %p104 = por %p102, %p103
      %p105 = scmp.ne.s32.totalorder %s94, %s97
      %p106 = scmp.eq.s32.totalorder %s23, 3
      %p107 = por %p105, %p106
      %p108 = scmp.ne.s32.totalorder %s97, %s98
      %p109 = scmp.eq.s32.totalorder %s23, 0
      %p110 = por %p108, %p109
      %p111 = scmp.ne.s32.totalorder %s97, %s98
      %p112 = scmp.eq.s32.totalorder %s24, 3
      %p113 = por %p111, %p112
      %p115 = scmp.ne.s32.totalorder %s98, %s114
      %p116 = scmp.eq.s32.totalorder %s24, 0
      %p117 = por %p115, %p116
      %s118 = ssub.s32 %s25, %s37
      %p119 = scmp.eq.s32.totalorder %s118, 0
      %s121 = sadd.s32 %s120, 1
      %s122 = scalar_select %p119, %s120, %s121
      %p125 = pneg %p119
      %p126 = scmp.eq.s32.totalorder %s18, 3
      %p127 = por %p125, %p126
      %p128 = scmp.ne.s32.totalorder %s120, %s123
      %p129 = scmp.eq.s32.totalorder %s18, 0
      %p130 = por %p128, %p129
      %p131 = scmp.ne.s32.totalorder %s120, %s123
      %p132 = scmp.eq.s32.totalorder %s23, 3
      %p133 = por %p131, %p132
      %p134 = scmp.ne.s32.totalorder %s123, %s124
      %p135 = scmp.eq.s32.totalorder %s23, 0
      %p136 = por %p134, %p135
      %p137 = scmp.ne.s32.totalorder %s123, %s124
      %p138 = scmp.eq.s32.totalorder %s24, 3
      %p139 = por %p137, %p138
      %p141 = scmp.ne.s32.totalorder %s124, %s140
      %p142 = scmp.eq.s32.totalorder %s24, 0
      %p143 = por %p141, %p142
      %p144 = scmp.le.s32.totalorder 1, %s18
      %p145 = scmp.lt.s32.totalorder %s18, 5
      %p146 = pnand %p144, %p145
      %p147 = pneg %p146
      // Predicated region
      $region9: #{tpu_custom_call.1} parent=5 // pred_check
        _
      $region10: #{tpu_custom_call.1} parent=5 // pred_check_branch
        %149 = sbr.rel (%p146) target = $region12
      $region11: #{tpu_custom_call.1} parent=5 // pred_region
        %s150 = ssub.s32 %s18, 1
      $region12: #{tpu_custom_call.1} parent=5 // pred_fallthru
        _
      %p151 = scmp.lt.s32.totalorder %s18, 4
      // Predicated region
      $region13: #{tpu_custom_call.1} parent=5 // pred_check
        %p152 = pneg %p151
      $region14: #{tpu_custom_call.1} parent=5 // pred_check_branch
        %154 = sbr.rel (%p152) target = $region16
      $region15: #{tpu_custom_call.1} parent=5 // pred_region
        // Predicated region
        $region17: #{tpu_custom_call.1} parent=15 // pred_check
          %p155 = pneg %p52
        $region18: #{tpu_custom_call.1} parent=15 // pred_check_branch
          %157 = sbr.rel (%p155) target = $region20
        $region19: #{tpu_custom_call.1} parent=15 // pred_region
          %s158 = sand.u32 %s42, 1
          %s159 = scalar_lea.sflag [#allocation5], %s158
          %s160 = sand.u32 %s42, 1
          %s161 = smul.addr %s160, 256
          %s162 = scalar_lea.vmem [#allocation4], %s161
          %s163 = smul.u32 32, %s25
          %s164 = smul.u32 2, %s26
          %s166 = ssub.s32 4096, 4096
          %167 = vsyncadd %s159, %s166
          %s168 = smul.addr %s163, 4
          %s169 = sadd.s32 %s164, %s168
          %s170 = smul.addr %s169, 64
          %s171 = scalar_lea.hbm %s0, %s170
          %s172 = sshll.u32 %s162, 4
          %s173 = int_to_ptr.vmem [resolvable:$true] %s172
          %178 = dma.hbm_to_vmem [thread:$0]  %s171, 4096, %s173, %s159, 256, 128, 8
        $region20: #{tpu_custom_call.1} parent=15 // pred_fallthru
          _
        // Predicated region
        $region21: #{tpu_custom_call.1} parent=15 // pred_check
          %p179 = pneg %p78
        $region22: #{tpu_custom_call.1} parent=15 // pred_check_branch
          %181 = sbr.rel (%p179) target = $region24
        $region23: #{tpu_custom_call.1} parent=15 // pred_region
          %s182 = sand.u32 %s18, 1
          %s183 = scalar_lea.sflag [#allocation8], %s182
          %s184 = sand.u32 %s68, 1
          %s185 = smul.addr %s184, 128
          %s186 = scalar_lea.vmem [#allocation7], %s185
          %s187 = smul.u32 32, %s26
          %s189 = ssub.s32 2048, 2048
          %190 = vsyncadd %s183, %s189
          %s191 = smul.addr %s187, 64
          %s192 = scalar_lea.hbm %s1, %s191
          %s193 = sshll.u32 %s186, 4
          %s194 = int_to_ptr.vmem [resolvable:$true] %s193
          %199 = dma.hbm_to_vmem [thread:$0]  %s192, 2048, %s194, %s183, 64, 64, 4
        $region24: #{tpu_custom_call.1} parent=15 // pred_fallthru
          _
        // Predicated region
        $region25: #{tpu_custom_call.1} parent=15 // pred_check
          %p200 = pneg %p104
        $region26: #{tpu_custom_call.1} parent=15 // pred_check_branch
          %202 = sbr.rel (%p200) target = $region28
        $region27: #{tpu_custom_call.1} parent=15 // pred_region
          %s203 = sand.u32 %s18, 1
          %s204 = scalar_lea.sflag [#allocation8], %s203
          %s205 = sand.u32 %s94, 1
          %s206 = smul.addr %s205, 256
          %s207 = scalar_lea.vmem [#allocation9], %s206
          %s208 = smul.u32 32, %s25
          %s210 = ssub.s32 4096, 4096
          %211 = vsyncadd %s204, %s210
          %s212 = smul.addr %s208, 128
          %s213 = scalar_lea.hbm %s2, %s212
          %s214 = sshll.u32 %s207, 4
          %s215 = int_to_ptr.vmem [resolvable:$true] %s214
          %220 = dma.hbm_to_vmem [thread:$0]  %s213, 4096, %s215, %s204, 128, 128, 8
        $region28: #{tpu_custom_call.1} parent=15 // pred_fallthru
          _
      $region16: #{tpu_custom_call.1} parent=5 // pred_fallthru
        _
      %p221 = scmp.le.s32.totalorder 1, %s18
      %p222 = scmp.lt.s32.totalorder %s18, 5
      %p223 = pnand %p221, %p222
      %p224 = pneg %p223
      // Predicated region
      $region29: #{tpu_custom_call.1} parent=5 // pred_check
        _
      $region30: #{tpu_custom_call.1} parent=5 // pred_check_branch
        %226 = sbr.rel (%p223) target = $region32
      $region31: #{tpu_custom_call.1} parent=5 // pred_region
        %s227 = ssub.s32 %s18, 1
        %s228 = sand.u32 %s45, 1
        %s229 = scalar_lea.sflag [#allocation5], %s228
        %s230 = sand.u32 %s45, 1
        %s231 = smul.addr %s230, 256
        %s232 = scalar_lea.vmem [#allocation4], %s231
        // Predicated region
        $region33: #{tpu_custom_call.1} parent=31 // pred_check
          %p233 = pneg %p58
        $region34: #{tpu_custom_call.1} parent=31 // pred_check_branch
          %235 = sbr.rel (%p233) target = $region36
        $region35: #{tpu_custom_call.1} parent=31 // pred_region
          %236 = dma.done %s229, 4096
        $region36: #{tpu_custom_call.1} parent=31 // pred_fallthru
          _
        %s237 = sand.u32 %s23, 1
        %s238 = scalar_lea.sflag [#allocation8], %s237
        %s239 = sand.u32 %s71, 1
        %s240 = smul.addr %s239, 128
        %s241 = scalar_lea.vmem [#allocation7], %s240
        // Predicated region
        $region37: #{tpu_custom_call.1} parent=31 // pred_check
          %p242 = pneg %p84
        $region38: #{tpu_custom_call.1} parent=31 // pred_check_branch
          %244 = sbr.rel (%p242) target = $region40
        $region39: #{tpu_custom_call.1} parent=31 // pred_region
          %245 = dma.done %s238, 2048
        $region40: #{tpu_custom_call.1} parent=31 // pred_fallthru
          _
        %s246 = sand.u32 %s23, 1
        %s247 = scalar_lea.sflag [#allocation8], %s246
        %s248 = sand.u32 %s97, 1
        %s249 = smul.addr %s248, 256
        %s250 = scalar_lea.vmem [#allocation9], %s249
        // Predicated region
        $region41: #{tpu_custom_call.1} parent=31 // pred_check
          %p251 = pneg %p110
        $region42: #{tpu_custom_call.1} parent=31 // pred_check_branch
          %253 = sbr.rel (%p251) target = $region44
        $region43: #{tpu_custom_call.1} parent=31 // pred_region
          %254 = dma.done %s247, 4096
        $region44: #{tpu_custom_call.1} parent=31 // pred_fallthru
          _
        %s255 = sand.u32 %s45, 1
        %s256 = scalar_lea.sflag [#allocation5], %s255
        %s257 = sand.u32 %s45, 1
        %s258 = smul.addr %s257, 256
        %s259 = scalar_lea.vmem [#allocation4], %s258
        %p260 = pneg %p58
        %p261 = pneg %p55
        %s262 = sand.u32 %s23, 1
        %s263 = scalar_lea.sflag [#allocation8], %s262
        %s264 = sand.u32 %s71, 1
        %s265 = smul.addr %s264, 128
        %s266 = scalar_lea.vmem [#allocation7], %s265
        %p267 = pneg %p84
        %p268 = pneg %p81
        %s269 = sand.u32 %s23, 1
        %s270 = scalar_lea.sflag [#allocation8], %s269
        %s271 = sand.u32 %s97, 1
        %s272 = smul.addr %s271, 256
        %s273 = scalar_lea.vmem [#allocation9], %s272
        %p274 = pneg %p110
        %p275 = pneg %p107
        %p276 = pneg %p136
        %p277 = pneg %p133
        %s278 = sand.u32 %s123, 1
        %s279 = scalar_lea.sflag [#allocation6], %s278
        %s280 = sand.u32 %s123, 1
        %s281 = smul.addr %s280, 256
        %s282 = scalar_lea.vmem [#allocation10], %s281
        %s283 = smul.u32 32, %s27
        %s284 = smul.u32 2, %s28
        %s285 = smul.u32 32, %s28
        %s286 = smul.u32 32, %s27
        %s287 = smul.u32 32, %s27
        %p289 = scmp.eq.s32.totalorder %s28, 0
        // Predicated region
        $region45: #{tpu_custom_call.1} parent=31 // pred_check
          %p290 = pneg %p289
        $region46: #{tpu_custom_call.1} parent=31 // pred_check_branch
          %292 = sbr.rel (%p290) target = $region48
        $region47: #{tpu_custom_call.1} parent=31 // pred_region
          %293 = vst [vmem:[#allocation2] sm:$0xff] 0.0
          %294 = vst [vmem:[#allocation2 + $0x8] sm:$0xff] 0.0
          %295 = vst [vmem:[#allocation2 + $0x10] sm:$0xff] 0.0
          %296 = vst [vmem:[#allocation2 + $0x18] sm:$0xff] 0.0
          %297 = vst [vmem:[#allocation2 + $0x20] sm:$0xff] 0.0
          %298 = vst [vmem:[#allocation2 + $0x28] sm:$0xff] 0.0
          %299 = vst [vmem:[#allocation2 + $0x30] sm:$0xff] 0.0
          %300 = vst [vmem:[#allocation2 + $0x38] sm:$0xff] 0.0
          %301 = vst [vmem:[#allocation2 + $0x40] sm:$0xff] 0.0
          %302 = vst [vmem:[#allocation2 + $0x48] sm:$0xff] 0.0
          %303 = vst [vmem:[#allocation2 + $0x50] sm:$0xff] 0.0
          %304 = vst [vmem:[#allocation2 + $0x58] sm:$0xff] 0.0
          %305 = vst [vmem:[#allocation2 + $0x60] sm:$0xff] 0.0
          %306 = vst [vmem:[#allocation2 + $0x68] sm:$0xff] 0.0
          %307 = vst [vmem:[#allocation2 + $0x70] sm:$0xff] 0.0
          %308 = vst [vmem:[#allocation2 + $0x78] sm:$0xff] 0.0
          %309 = vst [vmem:[#allocation2 + $0x80] sm:$0xff] 0.0
          %310 = vst [vmem:[#allocation2 + $0x88] sm:$0xff] 0.0
          %311 = vst [vmem:[#allocation2 + $0x90] sm:$0xff] 0.0
          %312 = vst [vmem:[#allocation2 + $0x98] sm:$0xff] 0.0
          %313 = vst [vmem:[#allocation2 + $0xa0] sm:$0xff] 0.0
          %314 = vst [vmem:[#allocation2 + $0xa8] sm:$0xff] 0.0
          %315 = vst [vmem:[#allocation2 + $0xb0] sm:$0xff] 0.0
          %316 = vst [vmem:[#allocation2 + $0xb8] sm:$0xff] 0.0
          %317 = vst [vmem:[#allocation2 + $0xc0] sm:$0xff] 0.0
          %318 = vst [vmem:[#allocation2 + $0xc8] sm:$0xff] 0.0
          %319 = vst [vmem:[#allocation2 + $0xd0] sm:$0xff] 0.0
          %320 = vst [vmem:[#allocation2 + $0xd8] sm:$0xff] 0.0
          %321 = vst [vmem:[#allocation2 + $0xe0] sm:$0xff] 0.0
          %322 = vst [vmem:[#allocation2 + $0xe8] sm:$0xff] 0.0
          %323 = vst [vmem:[#allocation2 + $0xf0] sm:$0xff] 0.0
          %324 = vst [vmem:[#allocation2 + $0xf8] sm:$0xff] 0.0
          %vm325 = vcmask 7168
          %326 = vst.msk [vmem:[#allocation3] sm:$0xff] %vm325, 0.0
          %327 = vst.msk [vmem:[#allocation3 + $0x8] sm:$0xff] %vm325, 0.0
          %328 = vst.msk [vmem:[#allocation3 + $0x10] sm:$0xff] %vm325, 0.0
          %329 = vst.msk [vmem:[#allocation3 + $0x18] sm:$0xff] %vm325, 0.0
          %330 = vst.msk [vmem:[#allocation3 + $0x20] sm:$0xff] %vm325, 0.0
          %331 = vst.msk [vmem:[#allocation3 + $0x28] sm:$0xff] %vm325, 0.0
          %332 = vst.msk [vmem:[#allocation3 + $0x30] sm:$0xff] %vm325, 0.0
          %333 = vst.msk [vmem:[#allocation3 + $0x38] sm:$0xff] %vm325, 0.0
          %334 = vst.msk [vmem:[#allocation3 + $0x40] sm:$0xff] %vm325, 0.0
          %335 = vst.msk [vmem:[#allocation3 + $0x48] sm:$0xff] %vm325, 0.0
          %336 = vst.msk [vmem:[#allocation3 + $0x50] sm:$0xff] %vm325, 0.0
          %337 = vst.msk [vmem:[#allocation3 + $0x58] sm:$0xff] %vm325, 0.0
          %338 = vst.msk [vmem:[#allocation3 + $0x60] sm:$0xff] %vm325, 0.0
          %339 = vst.msk [vmem:[#allocation3 + $0x68] sm:$0xff] %vm325, 0.0
          %340 = vst.msk [vmem:[#allocation3 + $0x70] sm:$0xff] %vm325, 0.0
          %341 = vst.msk [vmem:[#allocation3 + $0x78] sm:$0xff] %vm325, 0.0
          %342 = vst.msk [vmem:[#allocation3 + $0x80] sm:$0xff] %vm325, 0.0
          %343 = vst.msk [vmem:[#allocation3 + $0x88] sm:$0xff] %vm325, 0.0
          %344 = vst.msk [vmem:[#allocation3 + $0x90] sm:$0xff] %vm325, 0.0
          %345 = vst.msk [vmem:[#allocation3 + $0x98] sm:$0xff] %vm325, 0.0
          %346 = vst.msk [vmem:[#allocation3 + $0xa0] sm:$0xff] %vm325, 0.0
          %347 = vst.msk [vmem:[#allocation3 + $0xa8] sm:$0xff] %vm325, 0.0
          %348 = vst.msk [vmem:[#allocation3 + $0xb0] sm:$0xff] %vm325, 0.0
          %349 = vst.msk [vmem:[#allocation3 + $0xb8] sm:$0xff] %vm325, 0.0
          %350 = vst.msk [vmem:[#allocation3 + $0xc0] sm:$0xff] %vm325, 0.0
          %351 = vst.msk [vmem:[#allocation3 + $0xc8] sm:$0xff] %vm325, 0.0
          %352 = vst.msk [vmem:[#allocation3 + $0xd0] sm:$0xff] %vm325, 0.0
          %353 = vst.msk [vmem:[#allocation3 + $0xd8] sm:$0xff] %vm325, 0.0
          %354 = vst.msk [vmem:[#allocation3 + $0xe0] sm:$0xff] %vm325, 0.0
          %355 = vst.msk [vmem:[#allocation3 + $0xe8] sm:$0xff] %vm325, 0.0
          %356 = vst.msk [vmem:[#allocation3 + $0xf0] sm:$0xff] %vm325, 0.0
          %357 = vst.msk [vmem:[#allocation3 + $0xf8] sm:$0xff] %vm325, 0.0
        $region48: #{tpu_custom_call.1} parent=31 // pred_fallthru
          _
        %v358 = vld [vmem:[%s232] sm:$0xff]
        %v359 = vld [vmem:[%s232 + $0x8] sm:$0xff]
        %v360 = vld [vmem:[%s232 + $0x10] sm:$0xff]
        %v361 = vld [vmem:[%s232 + $0x18] sm:$0xff]
        %v362 = vld [vmem:[%s232 + $0x20] sm:$0xff]
        %v363 = vld [vmem:[%s232 + $0x28] sm:$0xff]
        %v364 = vld [vmem:[%s232 + $0x30] sm:$0xff]
        %v365 = vld [vmem:[%s232 + $0x38] sm:$0xff]
        %v366 = vld [vmem:[%s232 + $0x40] sm:$0xff]
        %v367 = vld [vmem:[%s232 + $0x48] sm:$0xff]
        %v368 = vld [vmem:[%s232 + $0x50] sm:$0xff]
        %v369 = vld [vmem:[%s232 + $0x58] sm:$0xff]
        %v370 = vld [vmem:[%s232 + $0x60] sm:$0xff]
        %v371 = vld [vmem:[%s232 + $0x68] sm:$0xff]
        %v372 = vld [vmem:[%s232 + $0x70] sm:$0xff]
        %v373 = vld [vmem:[%s232 + $0x78] sm:$0xff]
        %v374 = vld [vmem:[%s232 + $0x80] sm:$0xff]
        %v375 = vld [vmem:[%s232 + $0x88] sm:$0xff]
        %v376 = vld [vmem:[%s232 + $0x90] sm:$0xff]
        %v377 = vld [vmem:[%s232 + $0x98] sm:$0xff]
        %v378 = vld [vmem:[%s232 + $0xa0] sm:$0xff]
        %v379 = vld [vmem:[%s232 + $0xa8] sm:$0xff]
        %v380 = vld [vmem:[%s232 + $0xb0] sm:$0xff]
        %v381 = vld [vmem:[%s232 + $0xb8] sm:$0xff]
        %v382 = vld [vmem:[%s232 + $0xc0] sm:$0xff]
        %v383 = vld [vmem:[%s232 + $0xc8] sm:$0xff]
        %v384 = vld [vmem:[%s232 + $0xd0] sm:$0xff]
        %v385 = vld [vmem:[%s232 + $0xd8] sm:$0xff]
        %v386 = vld [vmem:[%s232 + $0xe0] sm:$0xff]
        %v387 = vld [vmem:[%s232 + $0xe8] sm:$0xff]
        %v388 = vld [vmem:[%s232 + $0xf0] sm:$0xff]
        %v389 = vld [vmem:[%s232 + $0xf8] sm:$0xff]
        %v390 = vld [vmem:[#allocation3] sm:$0xff]
        %v391 = vld [vmem:[#allocation3 + $0x8] sm:$0xff]
        %v392 = vld [vmem:[#allocation3 + $0x10] sm:$0xff]
        %v393 = vld [vmem:[#allocation3 + $0x18] sm:$0xff]
        %v394 = vld [vmem:[#allocation3 + $0x20] sm:$0xff]
        %v395 = vld [vmem:[#allocation3 + $0x28] sm:$0xff]
        %v396 = vld [vmem:[#allocation3 + $0x30] sm:$0xff]
        %v397 = vld [vmem:[#allocation3 + $0x38] sm:$0xff]
        %v398 = vld [vmem:[#allocation3 + $0x40] sm:$0xff]
        %v399 = vld [vmem:[#allocation3 + $0x48] sm:$0xff]
        %v400 = vld [vmem:[#allocation3 + $0x50] sm:$0xff]
        %v401 = vld [vmem:[#allocation3 + $0x58] sm:$0xff]
        %v402 = vld [vmem:[#allocation3 + $0x60] sm:$0xff]
        %v403 = vld [vmem:[#allocation3 + $0x68] sm:$0xff]
        %v404 = vld [vmem:[#allocation3 + $0x70] sm:$0xff]
        %v405 = vld [vmem:[#allocation3 + $0x78] sm:$0xff]
        %v406 = vld [vmem:[#allocation3 + $0x80] sm:$0xff]
        %v407 = vld [vmem:[#allocation3 + $0x88] sm:$0xff]
        %v408 = vld [vmem:[#allocation3 + $0x90] sm:$0xff]
        %v409 = vld [vmem:[#allocation3 + $0x98] sm:$0xff]
        %v410 = vld [vmem:[#allocation3 + $0xa0] sm:$0xff]
        %v411 = vld [vmem:[#allocation3 + $0xa8] sm:$0xff]
        %v412 = vld [vmem:[#allocation3 + $0xb0] sm:$0xff]
        %v413 = vld [vmem:[#allocation3 + $0xb8] sm:$0xff]
        %v414 = vld [vmem:[#allocation3 + $0xc0] sm:$0xff]
        %v415 = vld [vmem:[#allocation3 + $0xc8] sm:$0xff]
        %v416 = vld [vmem:[#allocation3 + $0xd0] sm:$0xff]
        %v417 = vld [vmem:[#allocation3 + $0xd8] sm:$0xff]
        %v418 = vld [vmem:[#allocation3 + $0xe0] sm:$0xff]
        %v419 = vld [vmem:[#allocation3 + $0xe8] sm:$0xff]
        %v420 = vld [vmem:[#allocation3 + $0xf0] sm:$0xff]
        %v421 = vld [vmem:[#allocation3 + $0xf8] sm:$0xff]
        %v422 = vunpack.c.l.bf16 %v358
        %v423 = vunpack.c.h.bf16 %v358
        %v424 = vunpack.c.l.bf16 %v359
        %v425 = vunpack.c.h.bf16 %v359
        %v426 = vunpack.c.l.bf16 %v360
        %v427 = vunpack.c.h.bf16 %v360
        %v428 = vunpack.c.l.bf16 %v361
        %v429 = vunpack.c.h.bf16 %v361
        %v430 = vunpack.c.l.bf16 %v362
        %v431 = vunpack.c.h.bf16 %v362
        %v432 = vunpack.c.l.bf16 %v363
        %v433 = vunpack.c.h.bf16 %v363
        %v434 = vunpack.c.l.bf16 %v364
        %v435 = vunpack.c.h.bf16 %v364
        %v436 = vunpack.c.l.bf16 %v365
        %v437 = vunpack.c.h.bf16 %v365
        %v438 = vunpack.c.l.bf16 %v366
        %v439 = vunpack.c.h.bf16 %v366
        %v440 = vunpack.c.l.bf16 %v367
        %v441 = vunpack.c.h.bf16 %v367
        %v442 = vunpack.c.l.bf16 %v368
        %v443 = vunpack.c.h.bf16 %v368
        %v444 = vunpack.c.l.bf16 %v369
        %v445 = vunpack.c.h.bf16 %v369
        %v446 = vunpack.c.l.bf16 %v370
        %v447 = vunpack.c.h.bf16 %v370
        %v448 = vunpack.c.l.bf16 %v371
        %v449 = vunpack.c.h.bf16 %v371
        %v450 = vunpack.c.l.bf16 %v372
        %v451 = vunpack.c.h.bf16 %v372
        %v452 = vunpack.c.l.bf16 %v373
        %v453 = vunpack.c.h.bf16 %v373
        %v454 = vunpack.c.l.bf16 %v374
        %v455 = vunpack.c.h.bf16 %v374
        %v456 = vunpack.c.l.bf16 %v375
        %v457 = vunpack.c.h.bf16 %v375
        %v458 = vunpack.c.l.bf16 %v376
        %v459 = vunpack.c.h.bf16 %v376
        %v460 = vunpack.c.l.bf16 %v377
        %v461 = vunpack.c.h.bf16 %v377
        %v462 = vunpack.c.l.bf16 %v378
        %v463 = vunpack.c.h.bf16 %v378
        %v464 = vunpack.c.l.bf16 %v379
        %v465 = vunpack.c.h.bf16 %v379
        %v466 = vunpack.c.l.bf16 %v380
        %v467 = vunpack.c.h.bf16 %v380
        %v468 = vunpack.c.l.bf16 %v381
        %v469 = vunpack.c.h.bf16 %v381
        %v470 = vunpack.c.l.bf16 %v382
        %v471 = vunpack.c.h.bf16 %v382
        %v472 = vunpack.c.l.bf16 %v383
        %v473 = vunpack.c.h.bf16 %v383
        %v474 = vunpack.c.l.bf16 %v384
        %v475 = vunpack.c.h.bf16 %v384
        %v476 = vunpack.c.l.bf16 %v385
        %v477 = vunpack.c.h.bf16 %v385
        %v478 = vunpack.c.l.bf16 %v386
        %v479 = vunpack.c.h.bf16 %v386
        %v480 = vunpack.c.l.bf16 %v387
        %v481 = vunpack.c.h.bf16 %v387
        %v482 = vunpack.c.l.bf16 %v388
        %v483 = vunpack.c.h.bf16 %v388
        %v484 = vunpack.c.l.bf16 %v389
        %v485 = vunpack.c.h.bf16 %v389
        %v486 = vadd.f32 %v422, %v423
        %487 = vadd.xlane.f32.xlu0 %v486
        %v488 = vpop.xlane.xlu0 %487
        %v489 = vadd.f32 %v424, %v425
        %490 = vadd.xlane.f32.xlu0 %v489
        %v491 = vpop.xlane.xlu0 %490
        %v492 = vadd.f32 %v426, %v427
        %493 = vadd.xlane.f32.xlu0 %v492
        %v494 = vpop.xlane.xlu0 %493
        %v495 = vadd.f32 %v428, %v429
        %496 = vadd.xlane.f32.xlu0 %v495
        %v497 = vpop.xlane.xlu0 %496
        %v498 = vadd.f32 %v430, %v431
        %499 = vadd.xlane.f32.xlu0 %v498
        %v500 = vpop.xlane.xlu0 %499
        %v501 = vadd.f32 %v432, %v433
        %502 = vadd.xlane.f32.xlu0 %v501
        %v503 = vpop.xlane.xlu0 %502
        %v504 = vadd.f32 %v434, %v435
        %505 = vadd.xlane.f32.xlu0 %v504
        %v506 = vpop.xlane.xlu0 %505
        %v507 = vadd.f32 %v436, %v437
        %508 = vadd.xlane.f32.xlu0 %v507
        %v509 = vpop.xlane.xlu0 %508
        %v510 = vadd.f32 %v438, %v439
        %511 = vadd.xlane.f32.xlu0 %v510
        %v512 = vpop.xlane.xlu0 %511
        %v513 = vadd.f32 %v440, %v441
        %514 = vadd.xlane.f32.xlu0 %v513
        %v515 = vpop.xlane.xlu0 %514
        %v516 = vadd.f32 %v442, %v443
        %517 = vadd.xlane.f32.xlu0 %v516
        %v518 = vpop.xlane.xlu0 %517
        %v519 = vadd.f32 %v444, %v445
        %520 = vadd.xlane.f32.xlu0 %v519
        %v521 = vpop.xlane.xlu0 %520
        %v522 = vadd.f32 %v446, %v447
        %523 = vadd.xlane.f32.xlu0 %v522
        %v524 = vpop.xlane.xlu0 %523
        %v525 = vadd.f32 %v448, %v449
        %526 = vadd.xlane.f32.xlu0 %v525
        %v527 = vpop.xlane.xlu0 %526
        %v528 = vadd.f32 %v450, %v451
        %529 = vadd.xlane.f32.xlu0 %v528
        %v530 = vpop.xlane.xlu0 %529
        %v531 = vadd.f32 %v452, %v453
        %532 = vadd.xlane.f32.xlu0 %v531
        %v533 = vpop.xlane.xlu0 %532
        %v534 = vadd.f32 %v454, %v455
        %535 = vadd.xlane.f32.xlu0 %v534
        %v536 = vpop.xlane.xlu0 %535
        %v537 = vadd.f32 %v456, %v457
        %538 = vadd.xlane.f32.xlu0 %v537
        %v539 = vpop.xlane.xlu0 %538
        %v540 = vadd.f32 %v458, %v459
        %541 = vadd.xlane.f32.xlu0 %v540
        %v542 = vpop.xlane.xlu0 %541
        %v543 = vadd.f32 %v460, %v461
        %544 = vadd.xlane.f32.xlu0 %v543
        %v545 = vpop.xlane.xlu0 %544
        %v546 = vadd.f32 %v462, %v463
        %547 = vadd.xlane.f32.xlu0 %v546
        %v548 = vpop.xlane.xlu0 %547
        %v549 = vadd.f32 %v464, %v465
        %550 = vadd.xlane.f32.xlu0 %v549
        %v551 = vpop.xlane.xlu0 %550
        %v552 = vadd.f32 %v466, %v467
        %553 = vadd.xlane.f32.xlu0 %v552
        %v554 = vpop.xlane.xlu0 %553
        %v555 = vadd.f32 %v468, %v469
        %556 = vadd.xlane.f32.xlu0 %v555
        %v557 = vpop.xlane.xlu0 %556
        %v558 = vadd.f32 %v470, %v471
        %559 = vadd.xlane.f32.xlu0 %v558
        %v560 = vpop.xlane.xlu0 %559
        %v561 = vadd.f32 %v472, %v473
        %562 = vadd.xlane.f32.xlu0 %v561
        %v563 = vpop.xlane.xlu0 %562
        %v564 = vadd.f32 %v474, %v475
        %565 = vadd.xlane.f32.xlu0 %v564
        %v566 = vpop.xlane.xlu0 %565
        %v567 = vadd.f32 %v476, %v477
        %568 = vadd.xlane.f32.xlu0 %v567
        %v569 = vpop.xlane.xlu0 %568
        %v570 = vadd.f32 %v478, %v479
        %571 = vadd.xlane.f32.xlu0 %v570
        %v572 = vpop.xlane.xlu0 %571
        %v573 = vadd.f32 %v480, %v481
        %574 = vadd.xlane.f32.xlu0 %v573
        %v575 = vpop.xlane.xlu0 %574
        %v576 = vadd.f32 %v482, %v483
        %577 = vadd.xlane.f32.xlu0 %v576
        %v578 = vpop.xlane.xlu0 %577
        %v579 = vadd.f32 %v484, %v485
        %580 = vadd.xlane.f32.xlu0 %v579
        %v581 = vpop.xlane.xlu0 %580
        %v582 = vadd.f32 %v390, %v488
        %v583 = vadd.f32 %v391, %v491
        %v584 = vadd.f32 %v392, %v494
        %v585 = vadd.f32 %v393, %v497
        %v586 = vadd.f32 %v394, %v500
        %v587 = vadd.f32 %v395, %v503
        %v588 = vadd.f32 %v396, %v506
        %v589 = vadd.f32 %v397, %v509
        %v590 = vadd.f32 %v398, %v512
        %v591 = vadd.f32 %v399, %v515
        %v592 = vadd.f32 %v400, %v518
        %v593 = vadd.f32 %v401, %v521
        %v594 = vadd.f32 %v402, %v524
        %v595 = vadd.f32 %v403, %v527
        %v596 = vadd.f32 %v404, %v530
        %v597 = vadd.f32 %v405, %v533
        %v598 = vadd.f32 %v406, %v536
        %v599 = vadd.f32 %v407, %v539
        %v600 = vadd.f32 %v408, %v542
        %v601 = vadd.f32 %v409, %v545
        %v602 = vadd.f32 %v410, %v548
        %v603 = vadd.f32 %v411, %v551
        %v604 = vadd.f32 %v412, %v554
        %v605 = vadd.f32 %v413, %v557
        %v606 = vadd.f32 %v414, %v560
        %v607 = vadd.f32 %v415, %v563
        %v608 = vadd.f32 %v416, %v566
        %v609 = vadd.f32 %v417, %v569
        %v610 = vadd.f32 %v418, %v572
        %v611 = vadd.f32 %v419, %v575
        %v612 = vadd.f32 %v420, %v578
        %v613 = vadd.f32 %v421, %v581
        %vm614 = vcmask 7168
        %615 = vst.msk [vmem:[#allocation3] sm:$0xff] %vm614, %v582
        %616 = vst.msk [vmem:[#allocation3 + $0x8] sm:$0xff] %vm614, %v583
        %617 = vst.msk [vmem:[#allocation3 + $0x10] sm:$0xff] %vm614, %v584
        %618 = vst.msk [vmem:[#allocation3 + $0x18] sm:$0xff] %vm614, %v585
        %619 = vst.msk [vmem:[#allocation3 + $0x20] sm:$0xff] %vm614, %v586
        %620 = vst.msk [vmem:[#allocation3 + $0x28] sm:$0xff] %vm614, %v587
        %621 = vst.msk [vmem:[#allocation3 + $0x30] sm:$0xff] %vm614, %v588
        %622 = vst.msk [vmem:[#allocation3 + $0x38] sm:$0xff] %vm614, %v589
        %623 = vst.msk [vmem:[#allocation3 + $0x40] sm:$0xff] %vm614, %v590
        %624 = vst.msk [vmem:[#allocation3 + $0x48] sm:$0xff] %vm614, %v591
        %625 = vst.msk [vmem:[#allocation3 + $0x50] sm:$0xff] %vm614, %v592
        %626 = vst.msk [vmem:[#allocation3 + $0x58] sm:$0xff] %vm614, %v593
        %627 = vst.msk [vmem:[#allocation3 + $0x60] sm:$0xff] %vm614, %v594
        %628 = vst.msk [vmem:[#allocation3 + $0x68] sm:$0xff] %vm614, %v595
        %629 = vst.msk [vmem:[#allocation3 + $0x70] sm:$0xff] %vm614, %v596
        %630 = vst.msk [vmem:[#allocation3 + $0x78] sm:$0xff] %vm614, %v597
        %631 = vst.msk [vmem:[#allocation3 + $0x80] sm:$0xff] %vm614, %v598
        %632 = vst.msk [vmem:[#allocation3 + $0x88] sm:$0xff] %vm614, %v599
        %633 = vst.msk [vmem:[#allocation3 + $0x90] sm:$0xff] %vm614, %v600
        %634 = vst.msk [vmem:[#allocation3 + $0x98] sm:$0xff] %vm614, %v601
        %635 = vst.msk [vmem:[#allocation3 + $0xa0] sm:$0xff] %vm614, %v602
        %636 = vst.msk [vmem:[#allocation3 + $0xa8] sm:$0xff] %vm614, %v603
        %637 = vst.msk [vmem:[#allocation3 + $0xb0] sm:$0xff] %vm614, %v604
        %638 = vst.msk [vmem:[#allocation3 + $0xb8] sm:$0xff] %vm614, %v605
        %639 = vst.msk [vmem:[#allocation3 + $0xc0] sm:$0xff] %vm614, %v606
        %640 = vst.msk [vmem:[#allocation3 + $0xc8] sm:$0xff] %vm614, %v607
        %641 = vst.msk [vmem:[#allocation3 + $0xd0] sm:$0xff] %vm614, %v608
        %642 = vst.msk [vmem:[#allocation3 + $0xd8] sm:$0xff] %vm614, %v609
        %643 = vst.msk [vmem:[#allocation3 + $0xe0] sm:$0xff] %vm614, %v610
        %644 = vst.msk [vmem:[#allocation3 + $0xe8] sm:$0xff] %vm614, %v611
        %645 = vst.msk [vmem:[#allocation3 + $0xf0] sm:$0xff] %vm614, %v612
        %646 = vst.msk [vmem:[#allocation3 + $0xf8] sm:$0xff] %vm614, %v613
        %v647 = vld [vmem:[#allocation2] sm:$0xff]
        %v648 = vld [vmem:[#allocation2 + $0x8] sm:$0xff]
        %v649 = vld [vmem:[#allocation2 + $0x10] sm:$0xff]
        %v650 = vld [vmem:[#allocation2 + $0x18] sm:$0xff]
        %v651 = vld [vmem:[#allocation2 + $0x20] sm:$0xff]
        %v652 = vld [vmem:[#allocation2 + $0x28] sm:$0xff]
        %v653 = vld [vmem:[#allocation2 + $0x30] sm:$0xff]
        %v654 = vld [vmem:[#allocation2 + $0x38] sm:$0xff]
        %v655 = vld [vmem:[#allocation2 + $0x40] sm:$0xff]
        %v656 = vld [vmem:[#allocation2 + $0x48] sm:$0xff]
        %v657 = vld [vmem:[#allocation2 + $0x50] sm:$0xff]
        %v658 = vld [vmem:[#allocation2 + $0x58] sm:$0xff]
        %v659 = vld [vmem:[#allocation2 + $0x60] sm:$0xff]
        %v660 = vld [vmem:[#allocation2 + $0x68] sm:$0xff]
        %v661 = vld [vmem:[#allocation2 + $0x70] sm:$0xff]
        %v662 = vld [vmem:[#allocation2 + $0x78] sm:$0xff]
        %v663 = vld [vmem:[#allocation2 + $0x80] sm:$0xff]
        %v664 = vld [vmem:[#allocation2 + $0x88] sm:$0xff]
        %v665 = vld [vmem:[#allocation2 + $0x90] sm:$0xff]
        %v666 = vld [vmem:[#allocation2 + $0x98] sm:$0xff]
        %v667 = vld [vmem:[#allocation2 + $0xa0] sm:$0xff]
        %v668 = vld [vmem:[#allocation2 + $0xa8] sm:$0xff]
        %v669 = vld [vmem:[#allocation2 + $0xb0] sm:$0xff]
        %v670 = vld [vmem:[#allocation2 + $0xb8] sm:$0xff]
        %v671 = vld [vmem:[#allocation2 + $0xc0] sm:$0xff]
        %v672 = vld [vmem:[#allocation2 + $0xc8] sm:$0xff]
        %v673 = vld [vmem:[#allocation2 + $0xd0] sm:$0xff]
        %v674 = vld [vmem:[#allocation2 + $0xd8] sm:$0xff]
        %v675 = vld [vmem:[#allocation2 + $0xe0] sm:$0xff]
        %v676 = vld [vmem:[#allocation2 + $0xe8] sm:$0xff]
        %v677 = vld [vmem:[#allocation2 + $0xf0] sm:$0xff]
        %v678 = vld [vmem:[#allocation2 + $0xf8] sm:$0xff]
        %v679 = vld [vmem:[%s241] sm:$0xf]
        %v680 = vld [vmem:[%s241 + $0x4] sm:$0xf]
        %v681 = vld [vmem:[%s241 + $0x8] sm:$0xf]
        %v682 = vld [vmem:[%s241 + $0xc] sm:$0xf]
        %v683 = vld [vmem:[%s241 + $0x10] sm:$0xf]
        %v684 = vld [vmem:[%s241 + $0x14] sm:$0xf]
        %v685 = vld [vmem:[%s241 + $0x18] sm:$0xf]
        %v686 = vld [vmem:[%s241 + $0x1c] sm:$0xf]
        %v687 = vld [vmem:[%s241 + $0x20] sm:$0xf]
        %v688 = vld [vmem:[%s241 + $0x24] sm:$0xf]
        %v689 = vld [vmem:[%s241 + $0x28] sm:$0xf]
        %v690 = vld [vmem:[%s241 + $0x2c] sm:$0xf]
        %v691 = vld [vmem:[%s241 + $0x30] sm:$0xf]
        %v692 = vld [vmem:[%s241 + $0x34] sm:$0xf]
        %v693 = vld [vmem:[%s241 + $0x38] sm:$0xf]
        %v694 = vld [vmem:[%s241 + $0x3c] sm:$0xf]
        %v695 = vld [vmem:[%s241 + $0x40] sm:$0xf]
        %v696 = vld [vmem:[%s241 + $0x44] sm:$0xf]
        %v697 = vld [vmem:[%s241 + $0x48] sm:$0xf]
        %v698 = vld [vmem:[%s241 + $0x4c] sm:$0xf]
        %v699 = vld [vmem:[%s241 + $0x50] sm:$0xf]
        %v700 = vld [vmem:[%s241 + $0x54] sm:$0xf]
        %v701 = vld [vmem:[%s241 + $0x58] sm:$0xf]
        %v702 = vld [vmem:[%s241 + $0x5c] sm:$0xf]
        %v703 = vld [vmem:[%s241 + $0x60] sm:$0xf]
        %v704 = vld [vmem:[%s241 + $0x64] sm:$0xf]
        %v705 = vld [vmem:[%s241 + $0x68] sm:$0xf]
        %v706 = vld [vmem:[%s241 + $0x6c] sm:$0xf]
        %v707 = vld [vmem:[%s241 + $0x70] sm:$0xf]
        %v708 = vld [vmem:[%s241 + $0x74] sm:$0xf]
        %v709 = vld [vmem:[%s241 + $0x78] sm:$0xf]
        %v710 = vld [vmem:[%s241 + $0x7c] sm:$0xf]
        %v743 = vunpack.c.l.b16 %v358
        %v744 = vunpack.c.h.b16 %v358
        %v745 = vunpack.c.l.b16 %v359
        %v746 = vunpack.c.h.b16 %v359
        %v747 = vunpack.c.l.b16 %v360
        %v748 = vunpack.c.h.b16 %v360
        %v749 = vunpack.c.l.b16 %v361
        %v750 = vunpack.c.h.b16 %v361
        %v751 = vunpack.c.l.b16 %v362
        %v752 = vunpack.c.h.b16 %v362
        %v753 = vunpack.c.l.b16 %v363
        %v754 = vunpack.c.h.b16 %v363
        %v755 = vunpack.c.l.b16 %v364
        %v756 = vunpack.c.h.b16 %v364
        %v757 = vunpack.c.l.b16 %v365
        %v758 = vunpack.c.h.b16 %v365
        %v759 = vunpack.c.l.b16 %v366
        %v760 = vunpack.c.h.b16 %v366
        %v761 = vunpack.c.l.b16 %v367
        %v762 = vunpack.c.h.b16 %v367
        %v763 = vunpack.c.l.b16 %v368
        %v764 = vunpack.c.h.b16 %v368
        %v765 = vunpack.c.l.b16 %v369
        %v766 = vunpack.c.h.b16 %v369
        %v767 = vunpack.c.l.b16 %v370
        %v768 = vunpack.c.h.b16 %v370
        %v769 = vunpack.c.l.b16 %v371
        %v770 = vunpack.c.h.b16 %v371
        %v771 = vunpack.c.l.b16 %v372
        %v772 = vunpack.c.h.b16 %v372
        %v773 = vunpack.c.l.b16 %v373
        %v774 = vunpack.c.h.b16 %v373
        %v775 = vunpack.c.l.b16 %v374
        %v776 = vunpack.c.h.b16 %v374
        %v777 = vunpack.c.l.b16 %v375
        %v778 = vunpack.c.h.b16 %v375
        %v779 = vunpack.c.l.b16 %v376
        %v780 = vunpack.c.h.b16 %v376
        %v781 = vunpack.c.l.b16 %v377
        %v782 = vunpack.c.h.b16 %v377
        %v783 = vunpack.c.l.b16 %v378
        %v784 = vunpack.c.h.b16 %v378
        %v785 = vunpack.c.l.b16 %v379
        %v786 = vunpack.c.h.b16 %v379
        %v787 = vunpack.c.l.b16 %v380
        %v788 = vunpack.c.h.b16 %v380
        %v789 = vunpack.c.l.b16 %v381
        %v790 = vunpack.c.h.b16 %v381
        %v791 = vunpack.c.l.b16 %v382
        %v792 = vunpack.c.h.b16 %v382
        %v793 = vunpack.c.l.b16 %v383
        %v794 = vunpack.c.h.b16 %v383
        %v795 = vunpack.c.l.b16 %v384
        %v796 = vunpack.c.h.b16 %v384
        %v797 = vunpack.c.l.b16 %v385
        %v798 = vunpack.c.h.b16 %v385
        %v799 = vunpack.c.l.b16 %v386
        %v800 = vunpack.c.h.b16 %v386
        %v801 = vunpack.c.l.b16 %v387
        %v802 = vunpack.c.h.b16 %v387
        %v803 = vunpack.c.l.b16 %v388
        %v804 = vunpack.c.h.b16 %v388
        %v805 = vunpack.c.l.b16 %v389
        %v806 = vunpack.c.h.b16 %v389
        %v807 = vpack.c.b16 %v745, %v743
        %v808 = vpack.c.b16 %v746, %v744
        %v809 = vpack.c.b16 %v749, %v747
        %v810 = vpack.c.b16 %v750, %v748
        %v811 = vpack.c.b16 %v753, %v751
        %v812 = vpack.c.b16 %v754, %v752
        %v813 = vpack.c.b16 %v757, %v755
        %v814 = vpack.c.b16 %v758, %v756
        %v815 = vpack.c.b16 %v761, %v759
        %v816 = vpack.c.b16 %v762, %v760
        %v817 = vpack.c.b16 %v765, %v763
        %v818 = vpack.c.b16 %v766, %v764
        %v819 = vpack.c.b16 %v769, %v767
        %v820 = vpack.c.b16 %v770, %v768
        %v821 = vpack.c.b16 %v773, %v771
        %v822 = vpack.c.b16 %v774, %v772
        %v823 = vpack.c.b16 %v777, %v775
        %v824 = vpack.c.b16 %v778, %v776
        %v825 = vpack.c.b16 %v781, %v779
        %v826 = vpack.c.b16 %v782, %v780
        %v827 = vpack.c.b16 %v785, %v783
        %v828 = vpack.c.b16 %v786, %v784
        %v829 = vpack.c.b16 %v789, %v787
        %v830 = vpack.c.b16 %v790, %v788
        %v831 = vpack.c.b16 %v793, %v791
        %v832 = vpack.c.b16 %v794, %v792
        %v833 = vpack.c.b16 %v797, %v795
        %v834 = vpack.c.b16 %v798, %v796
        %v835 = vpack.c.b16 %v801, %v799
        %v836 = vpack.c.b16 %v802, %v800
        %v837 = vpack.c.b16 %v805, %v803
        %v838 = vpack.c.b16 %v806, %v804
        %v903 = vunpack.c.l.b16 %v679
        %v904 = vunpack.c.l.b16 %v680
        %v905 = vunpack.c.l.b16 %v681
        %v906 = vunpack.c.l.b16 %v682
        %v907 = vunpack.c.l.b16 %v683
        %v908 = vunpack.c.l.b16 %v684
        %v909 = vunpack.c.l.b16 %v685
        %v910 = vunpack.c.l.b16 %v686
        %v911 = vunpack.c.l.b16 %v687
        %v912 = vunpack.c.l.b16 %v688
        %v913 = vunpack.c.l.b16 %v689
        %v914 = vunpack.c.l.b16 %v690
        %v915 = vunpack.c.l.b16 %v691
        %v916 = vunpack.c.l.b16 %v692
        %v917 = vunpack.c.l.b16 %v693
        %v918 = vunpack.c.l.b16 %v694
        %v919 = vunpack.c.l.b16 %v695
        %v920 = vunpack.c.l.b16 %v696
        %v921 = vunpack.c.l.b16 %v697
        %v922 = vunpack.c.l.b16 %v698
        %v923 = vunpack.c.l.b16 %v699
        %v924 = vunpack.c.l.b16 %v700
        %v925 = vunpack.c.l.b16 %v701
        %v926 = vunpack.c.l.b16 %v702
        %v927 = vunpack.c.l.b16 %v703
        %v928 = vunpack.c.l.b16 %v704
        %v929 = vunpack.c.l.b16 %v705
        %v930 = vunpack.c.l.b16 %v706
        %v931 = vunpack.c.l.b16 %v707
        %v932 = vunpack.c.l.b16 %v708
        %v933 = vunpack.c.l.b16 %v709
        %v934 = vunpack.c.l.b16 %v710
        %v935 = vpack.c.b16 %v904, %v903
        %v936 = vpack.c.b16 %v906, %v905
        %v937 = vpack.c.b16 %v908, %v907
        %v938 = vpack.c.b16 %v910, %v909
        %v939 = vpack.c.b16 %v912, %v911
        %v940 = vpack.c.b16 %v914, %v913
        %v941 = vpack.c.b16 %v916, %v915
        %v942 = vpack.c.b16 %v918, %v917
        %v943 = vpack.c.b16 %v920, %v919
        %v944 = vpack.c.b16 %v922, %v921
        %v945 = vpack.c.b16 %v924, %v923
        %v946 = vpack.c.b16 %v926, %v925
        %v947 = vpack.c.b16 %v928, %v927
        %v948 = vpack.c.b16 %v930, %v929
        %v949 = vpack.c.b16 %v932, %v931
        %v950 = vpack.c.b16 %v934, %v933
        %967 = vmatprep.subr.bf16.mxu0 0
        %968 = vmatpush1.bf16.msra.mxu0 %v935
        %969 = vmatprep.subr.bf16.mxu0 0
        %970 = vmatpush1.bf16.msra.mxu0 %v936
        %971 = vmatprep.subr.bf16.mxu0 0
        %972 = vmatpush1.bf16.msra.mxu0 %v937
        %973 = vmatprep.subr.bf16.mxu0 0
        %974 = vmatpush1.bf16.msra.mxu0 %v938
        %975 = vmatprep.subr.bf16.mxu0 0
        %976 = vmatpush1.bf16.msra.mxu0 %v939
        %977 = vmatprep.subr.bf16.mxu0 0
        %978 = vmatpush1.bf16.msra.mxu0 %v940
        %979 = vmatprep.subr.bf16.mxu0 0
        %980 = vmatpush1.bf16.msra.mxu0 %v941
        %981 = vmatprep.subr.bf16.mxu0 0
        %982 = vmatpush1.bf16.msra.mxu0 %v942
        %983 = vmatprep.subr.bf16.mxu0 0
        %984 = vmatpush1.bf16.msra.mxu0 %v943
        %985 = vmatprep.subr.bf16.mxu0 0
        %986 = vmatpush1.bf16.msra.mxu0 %v944
        %987 = vmatprep.subr.bf16.mxu0 0
        %988 = vmatpush1.bf16.msra.mxu0 %v945
        %989 = vmatprep.subr.bf16.mxu0 0
        %990 = vmatpush1.bf16.msra.mxu0 %v946
        %991 = vmatprep.subr.bf16.mxu0 0
        %992 = vmatpush1.bf16.msra.mxu0 %v947
        %993 = vmatprep.subr.bf16.mxu0 0
        %994 = vmatpush1.bf16.msra.mxu0 %v948
        %995 = vmatprep.subr.bf16.mxu0 0
        %996 = vmatpush1.bf16.msra.mxu0 %v949
        %997 = vmatprep.subr.bf16.mxu0 0
        %998 = vmatpush1.bf16.msra.mxu0 %v950
        %999 = vmatprep.mubr.bf16.mxu0 %v808
        %1000 = vmatmul.mubr.bf16.gmra.mrb[0].mxu0 %v807
        %v1001 = vpop.f32.mrb[0].mxu0
        %v1002 = vadd.f32 0.0, %v1001
        %v1003 = vpop.f32.mrb[0].mxu0
        %v1004 = vpop.f32.mrb[0].mxu0
        %v1005 = vadd.f32 0.0, %v1004
        %v1006 = vpop.f32.mrb[0].mxu0
        %1007 = vmatprep.mubr.bf16.mxu0 %v810
        %1008 = vmatmul.mubr.bf16.gmra.mrb[0].mxu0 %v809
        %v1009 = vpop.f32.mrb[0].mxu0
        %v1010 = vadd.f32 0.0, %v1009
        %v1011 = vpop.f32.mrb[0].mxu0
        %v1012 = vpop.f32.mrb[0].mxu0
        %v1013 = vadd.f32 0.0, %v1012
        %v1014 = vpop.f32.mrb[0].mxu0
        %1015 = vmatprep.mubr.bf16.mxu0 %v812
        %1016 = vmatmul.mubr.bf16.gmra.mrb[0].mxu0 %v811
        %v1017 = vpop.f32.mrb[0].mxu0
        %v1018 = vadd.f32 0.0, %v1017
        %v1019 = vpop.f32.mrb[0].mxu0
        %v1020 = vpop.f32.mrb[0].mxu0
        %v1021 = vadd.f32 0.0, %v1020
        %v1022 = vpop.f32.mrb[0].mxu0
        %1023 = vmatprep.mubr.bf16.mxu0 %v814
        %1024 = vmatmul.mubr.bf16.gmra.mrb[0].mxu0 %v813
        %v1025 = vpop.f32.mrb[0].mxu0
        %v1026 = vadd.f32 0.0, %v1025
        %v1027 = vpop.f32.mrb[0].mxu0
        %v1028 = vpop.f32.mrb[0].mxu0
        %v1029 = vadd.f32 0.0, %v1028
        %v1030 = vpop.f32.mrb[0].mxu0
        %1031 = vmatprep.mubr.bf16.mxu0 %v816
        %1032 = vmatmul.mubr.bf16.gmra.mrb[0].mxu0 %v815
        %v1033 = vpop.f32.mrb[0].mxu0
        %v1034 = vadd.f32 0.0, %v1033
        %v1035 = vpop.f32.mrb[0].mxu0
        %v1036 = vpop.f32.mrb[0].mxu0
        %v1037 = vadd.f32 0.0, %v1036
        %v1038 = vpop.f32.mrb[0].mxu0
        %1039 = vmatprep.mubr.bf16.mxu0 %v818
        %1040 = vmatmul.mubr.bf16.gmra.mrb[0].mxu0 %v817
        %v1041 = vpop.f32.mrb[0].mxu0
        %v1042 = vadd.f32 0.0, %v1041
        %v1043 = vpop.f32.mrb[0].mxu0
        %v1044 = vpop.f32.mrb[0].mxu0
        %v1045 = vadd.f32 0.0, %v1044
        %v1046 = vpop.f32.mrb[0].mxu0
        %1047 = vmatprep.mubr.bf16.mxu0 %v820
        %1048 = vmatmul.mubr.bf16.gmra.mrb[0].mxu0 %v819
        %v1049 = vpop.f32.mrb[0].mxu0
        %v1050 = vadd.f32 0.0, %v1049
        %v1051 = vpop.f32.mrb[0].mxu0
        %v1052 = vpop.f32.mrb[0].mxu0
        %v1053 = vadd.f32 0.0, %v1052
        %v1054 = vpop.f32.mrb[0].mxu0
        %1055 = vmatprep.mubr.bf16.mxu0 %v822
        %1056 = vmatmul.mubr.bf16.gmra.mrb[0].mxu0 %v821
        %v1057 = vpop.f32.mrb[0].mxu0
        %v1058 = vadd.f32 0.0, %v1057
        %v1059 = vpop.f32.mrb[0].mxu0
        %v1060 = vpop.f32.mrb[0].mxu0
        %v1061 = vadd.f32 0.0, %v1060
        %v1062 = vpop.f32.mrb[0].mxu0
        %1063 = vmatprep.mubr.bf16.mxu0 %v824
        %1064 = vmatmul.mubr.bf16.gmra.mrb[0].mxu0 %v823
        %v1065 = vpop.f32.mrb[0].mxu0
        %v1066 = vadd.f32 0.0, %v1065
        %v1067 = vpop.f32.mrb[0].mxu0
        %v1068 = vpop.f32.mrb[0].mxu0
        %v1069 = vadd.f32 0.0, %v1068
        %v1070 = vpop.f32.mrb[0].mxu0
        %1071 = vmatprep.mubr.bf16.mxu0 %v826
        %1072 = vmatmul.mubr.bf16.gmra.mrb[0].mxu0 %v825
        %v1073 = vpop.f32.mrb[0].mxu0
        %v1074 = vadd.f32 0.0, %v1073
        %v1075 = vpop.f32.mrb[0].mxu0
        %v1076 = vpop.f32.mrb[0].mxu0
        %v1077 = vadd.f32 0.0, %v1076
        %v1078 = vpop.f32.mrb[0].mxu0
        %1079 = vmatprep.mubr.bf16.mxu0 %v828
        %1080 = vmatmul.mubr.bf16.gmra.mrb[0].mxu0 %v827
        %v1081 = vpop.f32.mrb[0].mxu0
        %v1082 = vadd.f32 0.0, %v1081
        %v1083 = vpop.f32.mrb[0].mxu0
        %v1084 = vpop.f32.mrb[0].mxu0
        %v1085 = vadd.f32 0.0, %v1084
        %v1086 = vpop.f32.mrb[0].mxu0
        %1087 = vmatprep.mubr.bf16.mxu0 %v830
        %1088 = vmatmul.mubr.bf16.gmra.mrb[0].mxu0 %v829
        %v1089 = vpop.f32.mrb[0].mxu0
        %v1090 = vadd.f32 0.0, %v1089
        %v1091 = vpop.f32.mrb[0].mxu0
        %v1092 = vpop.f32.mrb[0].mxu0
        %v1093 = vadd.f32 0.0, %v1092
        %v1094 = vpop.f32.mrb[0].mxu0
        %1095 = vmatprep.mubr.bf16.mxu0 %v832
        %1096 = vmatmul.mubr.bf16.gmra.mrb[0].mxu0 %v831
        %v1097 = vpop.f32.mrb[0].mxu0
        %v1098 = vadd.f32 0.0, %v1097
        %v1099 = vpop.f32.mrb[0].mxu0
        %v1100 = vpop.f32.mrb[0].mxu0
        %v1101 = vadd.f32 0.0, %v1100
        %v1102 = vpop.f32.mrb[0].mxu0
        %1103 = vmatprep.mubr.bf16.mxu0 %v834
        %1104 = vmatmul.mubr.bf16.gmra.mrb[0].mxu0 %v833
        %v1105 = vpop.f32.mrb[0].mxu0
        %v1106 = vadd.f32 0.0, %v1105
        %v1107 = vpop.f32.mrb[0].mxu0
        %v1108 = vpop.f32.mrb[0].mxu0
        %v1109 = vadd.f32 0.0, %v1108
        %v1110 = vpop.f32.mrb[0].mxu0
        %1111 = vmatprep.mubr.bf16.mxu0 %v836
        %1112 = vmatmul.mubr.bf16.gmra.mrb[0].mxu0 %v835
        %v1113 = vpop.f32.mrb[0].mxu0
        %v1114 = vadd.f32 0.0, %v1113
        %v1115 = vpop.f32.mrb[0].mxu0
        %v1116 = vpop.f32.mrb[0].mxu0
        %v1117 = vadd.f32 0.0, %v1116
        %v1118 = vpop.f32.mrb[0].mxu0
        %1119 = vmatprep.mubr.bf16.mxu0 %v838
        %1120 = vmatmul.mubr.bf16.gmra.mrb[0].mxu0 %v837
        %v1121 = vpop.f32.mrb[0].mxu0
        %v1122 = vadd.f32 0.0, %v1121
        %v1123 = vpop.f32.mrb[0].mxu0
        %v1124 = vpop.f32.mrb[0].mxu0
        %v1125 = vadd.f32 0.0, %v1124
        %v1126 = vpop.f32.mrb[0].mxu0
        %1127 = vdwg.mxu0
        %v1128 = vadd.f32 %v647, %v1002
        %v1129 = vadd.f32 %v648, %v1005
        %v1130 = vadd.f32 %v649, %v1010
        %v1131 = vadd.f32 %v650, %v1013
        %v1132 = vadd.f32 %v651, %v1018
        %v1133 = vadd.f32 %v652, %v1021
        %v1134 = vadd.f32 %v653, %v1026
        %v1135 = vadd.f32 %v654, %v1029
        %v1136 = vadd.f32 %v655, %v1034
        %v1137 = vadd.f32 %v656, %v1037
        %v1138 = vadd.f32 %v657, %v1042
        %v1139 = vadd.f32 %v658, %v1045
        %v1140 = vadd.f32 %v659, %v1050
        %v1141 = vadd.f32 %v660, %v1053
        %v1142 = vadd.f32 %v661, %v1058
        %v1143 = vadd.f32 %v662, %v1061
        %v1144 = vadd.f32 %v663, %v1066
        %v1145 = vadd.f32 %v664, %v1069
        %v1146 = vadd.f32 %v665, %v1074
        %v1147 = vadd.f32 %v666, %v1077
        %v1148 = vadd.f32 %v667, %v1082
        %v1149 = vadd.f32 %v668, %v1085
        %v1150 = vadd.f32 %v669, %v1090
        %v1151 = vadd.f32 %v670, %v1093
        %v1152 = vadd.f32 %v671, %v1098
        %v1153 = vadd.f32 %v672, %v1101
        %v1154 = vadd.f32 %v673, %v1106
        %v1155 = vadd.f32 %v674, %v1109
        %v1156 = vadd.f32 %v675, %v1114
        %v1157 = vadd.f32 %v676, %v1117
        %v1158 = vadd.f32 %v677, %v1122
        %v1159 = vadd.f32 %v678, %v1125
        %1160 = vst [vmem:[#allocation2] sm:$0xff] %v1128
        %1161 = vst [vmem:[#allocation2 + $0x8] sm:$0xff] %v1129
        %1162 = vst [vmem:[#allocation2 + $0x10] sm:$0xff] %v1130
        %1163 = vst [vmem:[#allocation2 + $0x18] sm:$0xff] %v1131
        %1164 = vst [vmem:[#allocation2 + $0x20] sm:$0xff] %v1132
        %1165 = vst [vmem:[#allocation2 + $0x28] sm:$0xff] %v1133
        %1166 = vst [vmem:[#allocation2 + $0x30] sm:$0xff] %v1134
        %1167 = vst [vmem:[#allocation2 + $0x38] sm:$0xff] %v1135
        %1168 = vst [vmem:[#allocation2 + $0x40] sm:$0xff] %v1136
        %1169 = vst [vmem:[#allocation2 + $0x48] sm:$0xff] %v1137
        %1170 = vst [vmem:[#allocation2 + $0x50] sm:$0xff] %v1138
        %1171 = vst [vmem:[#allocation2 + $0x58] sm:$0xff] %v1139
        %1172 = vst [vmem:[#allocation2 + $0x60] sm:$0xff] %v1140
        %1173 = vst [vmem:[#allocation2 + $0x68] sm:$0xff] %v1141
        %1174 = vst [vmem:[#allocation2 + $0x70] sm:$0xff] %v1142
        %1175 = vst [vmem:[#allocation2 + $0x78] sm:$0xff] %v1143
        %1176 = vst [vmem:[#allocation2 + $0x80] sm:$0xff] %v1144
        %1177 = vst [vmem:[#allocation2 + $0x88] sm:$0xff] %v1145
        %1178 = vst [vmem:[#allocation2 + $0x90] sm:$0xff] %v1146
        %1179 = vst [vmem:[#allocation2 + $0x98] sm:$0xff] %v1147
        %1180 = vst [vmem:[#allocation2 + $0xa0] sm:$0xff] %v1148
        %1181 = vst [vmem:[#allocation2 + $0xa8] sm:$0xff] %v1149
        %1182 = vst [vmem:[#allocation2 + $0xb0] sm:$0xff] %v1150
        %1183 = vst [vmem:[#allocation2 + $0xb8] sm:$0xff] %v1151
        %1184 = vst [vmem:[#allocation2 + $0xc0] sm:$0xff] %v1152
        %1185 = vst [vmem:[#allocation2 + $0xc8] sm:$0xff] %v1153
        %1186 = vst [vmem:[#allocation2 + $0xd0] sm:$0xff] %v1154
        %1187 = vst [vmem:[#allocation2 + $0xd8] sm:$0xff] %v1155
        %1188 = vst [vmem:[#allocation2 + $0xe0] sm:$0xff] %v1156
        %1189 = vst [vmem:[#allocation2 + $0xe8] sm:$0xff] %v1157
        %1190 = vst [vmem:[#allocation2 + $0xf0] sm:$0xff] %v1158
        %1191 = vst [vmem:[#allocation2 + $0xf8] sm:$0xff] %v1159
        %p1192 = scmp.eq.s32.totalorder %s28, 1
        // Predicated region
        $region49: #{tpu_custom_call.1} parent=31 // pred_check
          %p1193 = pneg %p1192
        $region50: #{tpu_custom_call.1} parent=31 // pred_check_branch
          %1195 = sbr.rel (%p1193) target = $region52
        $region51: #{tpu_custom_call.1} parent=31 // pred_region
          %v1196 = vld [vmem:[%s250] sm:$0xff]
          %v1197 = vld [vmem:[%s250 + $0x8] sm:$0xff]
          %v1198 = vld [vmem:[%s250 + $0x10] sm:$0xff]
          %v1199 = vld [vmem:[%s250 + $0x18] sm:$0xff]
          %v1200 = vld [vmem:[%s250 + $0x20] sm:$0xff]
          %v1201 = vld [vmem:[%s250 + $0x28] sm:$0xff]
          %v1202 = vld [vmem:[%s250 + $0x30] sm:$0xff]
          %v1203 = vld [vmem:[%s250 + $0x38] sm:$0xff]
          %v1204 = vld [vmem:[%s250 + $0x40] sm:$0xff]
          %v1205 = vld [vmem:[%s250 + $0x48] sm:$0xff]
          %v1206 = vld [vmem:[%s250 + $0x50] sm:$0xff]
          %v1207 = vld [vmem:[%s250 + $0x58] sm:$0xff]
          %v1208 = vld [vmem:[%s250 + $0x60] sm:$0xff]
          %v1209 = vld [vmem:[%s250 + $0x68] sm:$0xff]
          %v1210 = vld [vmem:[%s250 + $0x70] sm:$0xff]
          %v1211 = vld [vmem:[%s250 + $0x78] sm:$0xff]
          %v1212 = vld [vmem:[%s250 + $0x80] sm:$0xff]
          %v1213 = vld [vmem:[%s250 + $0x88] sm:$0xff]
          %v1214 = vld [vmem:[%s250 + $0x90] sm:$0xff]
          %v1215 = vld [vmem:[%s250 + $0x98] sm:$0xff]
          %v1216 = vld [vmem:[%s250 + $0xa0] sm:$0xff]
          %v1217 = vld [vmem:[%s250 + $0xa8] sm:$0xff]
          %v1218 = vld [vmem:[%s250 + $0xb0] sm:$0xff]
          %v1219 = vld [vmem:[%s250 + $0xb8] sm:$0xff]
          %v1220 = vld [vmem:[%s250 + $0xc0] sm:$0xff]
          %v1221 = vld [vmem:[%s250 + $0xc8] sm:$0xff]
          %v1222 = vld [vmem:[%s250 + $0xd0] sm:$0xff]
          %v1223 = vld [vmem:[%s250 + $0xd8] sm:$0xff]
          %v1224 = vld [vmem:[%s250 + $0xe0] sm:$0xff]
          %v1225 = vld [vmem:[%s250 + $0xe8] sm:$0xff]
          %v1226 = vld [vmem:[%s250 + $0xf0] sm:$0xff]
          %v1227 = vld [vmem:[%s250 + $0xf8] sm:$0xff]
          %v1228 = vmul.f32 %v1196, %v1196
          %v1229 = vmul.f32 %v1197, %v1197
          %v1230 = vmul.f32 %v1198, %v1198
          %v1231 = vmul.f32 %v1199, %v1199
          %v1232 = vmul.f32 %v1200, %v1200
          %v1233 = vmul.f32 %v1201, %v1201
          %v1234 = vmul.f32 %v1202, %v1202
          %v1235 = vmul.f32 %v1203, %v1203
          %v1236 = vmul.f32 %v1204, %v1204
          %v1237 = vmul.f32 %v1205, %v1205
          %v1238 = vmul.f32 %v1206, %v1206
          %v1239 = vmul.f32 %v1207, %v1207
          %v1240 = vmul.f32 %v1208, %v1208
          %v1241 = vmul.f32 %v1209, %v1209
          %v1242 = vmul.f32 %v1210, %v1210
          %v1243 = vmul.f32 %v1211, %v1211
          %v1244 = vmul.f32 %v1212, %v1212
          %v1245 = vmul.f32 %v1213, %v1213
          %v1246 = vmul.f32 %v1214, %v1214
          %v1247 = vmul.f32 %v1215, %v1215
          %v1248 = vmul.f32 %v1216, %v1216
          %v1249 = vmul.f32 %v1217, %v1217
          %v1250 = vmul.f32 %v1218, %v1218
          %v1251 = vmul.f32 %v1219, %v1219
          %v1252 = vmul.f32 %v1220, %v1220
          %v1253 = vmul.f32 %v1221, %v1221
          %v1254 = vmul.f32 %v1222, %v1222
          %v1255 = vmul.f32 %v1223, %v1223
          %v1256 = vmul.f32 %v1224, %v1224
          %v1257 = vmul.f32 %v1225, %v1225
          %v1258 = vmul.f32 %v1226, %v1226
          %v1259 = vmul.f32 %v1227, %v1227
          %1260 = vadd.xlane.f32.xlu0 %v1228
          %v1261 = vpop.xlane.xlu0 %1260
          %1262 = vadd.xlane.f32.xlu0 %v1229
          %v1263 = vpop.xlane.xlu0 %1262
          %1264 = vadd.xlane.f32.xlu0 %v1230
          %v1265 = vpop.xlane.xlu0 %1264
          %1266 = vadd.xlane.f32.xlu0 %v1231
          %v1267 = vpop.xlane.xlu0 %1266
          %1268 = vadd.xlane.f32.xlu0 %v1232
          %v1269 = vpop.xlane.xlu0 %1268
          %1270 = vadd.xlane.f32.xlu0 %v1233
          %v1271 = vpop.xlane.xlu0 %1270
          %1272 = vadd.xlane.f32.xlu0 %v1234
          %v1273 = vpop.xlane.xlu0 %1272
          %1274 = vadd.xlane.f32.xlu0 %v1235
          %v1275 = vpop.xlane.xlu0 %1274
          %1276 = vadd.xlane.f32.xlu0 %v1236
          %v1277 = vpop.xlane.xlu0 %1276
          %1278 = vadd.xlane.f32.xlu0 %v1237
          %v1279 = vpop.xlane.xlu0 %1278
          %1280 = vadd.xlane.f32.xlu0 %v1238
          %v1281 = vpop.xlane.xlu0 %1280
          %1282 = vadd.xlane.f32.xlu0 %v1239
          %v1283 = vpop.xlane.xlu0 %1282
          %1284 = vadd.xlane.f32.xlu0 %v1240
          %v1285 = vpop.xlane.xlu0 %1284
          %1286 = vadd.xlane.f32.xlu0 %v1241
          %v1287 = vpop.xlane.xlu0 %1286
          %1288 = vadd.xlane.f32.xlu0 %v1242
          %v1289 = vpop.xlane.xlu0 %1288
          %1290 = vadd.xlane.f32.xlu0 %v1243
          %v1291 = vpop.xlane.xlu0 %1290
          %1292 = vadd.xlane.f32.xlu0 %v1244
          %v1293 = vpop.xlane.xlu0 %1292
          %1294 = vadd.xlane.f32.xlu0 %v1245
          %v1295 = vpop.xlane.xlu0 %1294
          %1296 = vadd.xlane.f32.xlu0 %v1246
          %v1297 = vpop.xlane.xlu0 %1296
          %1298 = vadd.xlane.f32.xlu0 %v1247
          %v1299 = vpop.xlane.xlu0 %1298
          %1300 = vadd.xlane.f32.xlu0 %v1248
          %v1301 = vpop.xlane.xlu0 %1300
          %1302 = vadd.xlane.f32.xlu0 %v1249
          %v1303 = vpop.xlane.xlu0 %1302
          %1304 = vadd.xlane.f32.xlu0 %v1250
          %v1305 = vpop.xlane.xlu0 %1304
          %1306 = vadd.xlane.f32.xlu0 %v1251
          %v1307 = vpop.xlane.xlu0 %1306
          %1308 = vadd.xlane.f32.xlu0 %v1252
          %v1309 = vpop.xlane.xlu0 %1308
          %1310 = vadd.xlane.f32.xlu0 %v1253
          %v1311 = vpop.xlane.xlu0 %1310
          %1312 = vadd.xlane.f32.xlu0 %v1254
          %v1313 = vpop.xlane.xlu0 %1312
          %1314 = vadd.xlane.f32.xlu0 %v1255
          %v1315 = vpop.xlane.xlu0 %1314
          %1316 = vadd.xlane.f32.xlu0 %v1256
          %v1317 = vpop.xlane.xlu0 %1316
          %1318 = vadd.xlane.f32.xlu0 %v1257
          %v1319 = vpop.xlane.xlu0 %1318
          %1320 = vadd.xlane.f32.xlu0 %v1258
          %v1321 = vpop.xlane.xlu0 %1320
          %1322 = vadd.xlane.f32.xlu0 %v1259
          %v1323 = vpop.xlane.xlu0 %1322
          %v1324 = vrsqrt.pop %v1261
          %v1325 = vmul.f32 %v1261, %v1324
          %vm1326 = vcmp.eq.f32.partialorder %v1261, inf
          %v1327 = vsel %vm1326, %v1261, %v1325
          %vm1328 = vcmp.eq.f32.partialorder %v1261, 0.0
          %v1329 = vand.u32 %v1261, 2147483648
          %v1330 = vsel %vm1328, %v1329, %v1327
          %v1331 = vrsqrt.pop %v1263
          %v1332 = vmul.f32 %v1263, %v1331
          %vm1333 = vcmp.eq.f32.partialorder %v1263, inf
          %v1334 = vsel %vm1333, %v1263, %v1332
          %vm1335 = vcmp.eq.f32.partialorder %v1263, 0.0
          %v1336 = vand.u32 %v1263, 2147483648
          %v1337 = vsel %vm1335, %v1336, %v1334
          %v1338 = vrsqrt.pop %v1265
          %v1339 = vmul.f32 %v1265, %v1338
          %vm1340 = vcmp.eq.f32.partialorder %v1265, inf
          %v1341 = vsel %vm1340, %v1265, %v1339
          %vm1342 = vcmp.eq.f32.partialorder %v1265, 0.0
          %v1343 = vand.u32 %v1265, 2147483648
          %v1344 = vsel %vm1342, %v1343, %v1341
          %v1345 = vrsqrt.pop %v1267
          %v1346 = vmul.f32 %v1267, %v1345
          %vm1347 = vcmp.eq.f32.partialorder %v1267, inf
          %v1348 = vsel %vm1347, %v1267, %v1346
          %vm1349 = vcmp.eq.f32.partialorder %v1267, 0.0
          %v1350 = vand.u32 %v1267, 2147483648
          %v1351 = vsel %vm1349, %v1350, %v1348
          %v1352 = vrsqrt.pop %v1269
          %v1353 = vmul.f32 %v1269, %v1352
          %vm1354 = vcmp.eq.f32.partialorder %v1269, inf
          %v1355 = vsel %vm1354, %v1269, %v1353
          %vm1356 = vcmp.eq.f32.partialorder %v1269, 0.0
          %v1357 = vand.u32 %v1269, 2147483648
          %v1358 = vsel %vm1356, %v1357, %v1355
          %v1359 = vrsqrt.pop %v1271
          %v1360 = vmul.f32 %v1271, %v1359
          %vm1361 = vcmp.eq.f32.partialorder %v1271, inf
          %v1362 = vsel %vm1361, %v1271, %v1360
          %vm1363 = vcmp.eq.f32.partialorder %v1271, 0.0
          %v1364 = vand.u32 %v1271, 2147483648
          %v1365 = vsel %vm1363, %v1364, %v1362
          %v1366 = vrsqrt.pop %v1273
          %v1367 = vmul.f32 %v1273, %v1366
          %vm1368 = vcmp.eq.f32.partialorder %v1273, inf
          %v1369 = vsel %vm1368, %v1273, %v1367
          %vm1370 = vcmp.eq.f32.partialorder %v1273, 0.0
          %v1371 = vand.u32 %v1273, 2147483648
          %v1372 = vsel %vm1370, %v1371, %v1369
          %v1373 = vrsqrt.pop %v1275
          %v1374 = vmul.f32 %v1275, %v1373
          %vm1375 = vcmp.eq.f32.partialorder %v1275, inf
          %v1376 = vsel %vm1375, %v1275, %v1374
          %vm1377 = vcmp.eq.f32.partialorder %v1275, 0.0
          %v1378 = vand.u32 %v1275, 2147483648
          %v1379 = vsel %vm1377, %v1378, %v1376
          %v1380 = vrsqrt.pop %v1277
          %v1381 = vmul.f32 %v1277, %v1380
          %vm1382 = vcmp.eq.f32.partialorder %v1277, inf
          %v1383 = vsel %vm1382, %v1277, %v1381
          %vm1384 = vcmp.eq.f32.partialorder %v1277, 0.0
          %v1385 = vand.u32 %v1277, 2147483648
          %v1386 = vsel %vm1384, %v1385, %v1383
          %v1387 = vrsqrt.pop %v1279
          %v1388 = vmul.f32 %v1279, %v1387
          %vm1389 = vcmp.eq.f32.partialorder %v1279, inf
          %v1390 = vsel %vm1389, %v1279, %v1388
          %vm1391 = vcmp.eq.f32.partialorder %v1279, 0.0
          %v1392 = vand.u32 %v1279, 2147483648
          %v1393 = vsel %vm1391, %v1392, %v1390
          %v1394 = vrsqrt.pop %v1281
          %v1395 = vmul.f32 %v1281, %v1394
          %vm1396 = vcmp.eq.f32.partialorder %v1281, inf
          %v1397 = vsel %vm1396, %v1281, %v1395
          %vm1398 = vcmp.eq.f32.partialorder %v1281, 0.0
          %v1399 = vand.u32 %v1281, 2147483648
          %v1400 = vsel %vm1398, %v1399, %v1397
          %v1401 = vrsqrt.pop %v1283
          %v1402 = vmul.f32 %v1283, %v1401
          %vm1403 = vcmp.eq.f32.partialorder %v1283, inf
          %v1404 = vsel %vm1403, %v1283, %v1402
          %vm1405 = vcmp.eq.f32.partialorder %v1283, 0.0
          %v1406 = vand.u32 %v1283, 2147483648
          %v1407 = vsel %vm1405, %v1406, %v1404
          %v1408 = vrsqrt.pop %v1285
          %v1409 = vmul.f32 %v1285, %v1408
          %vm1410 = vcmp.eq.f32.partialorder %v1285, inf
          %v1411 = vsel %vm1410, %v1285, %v1409
          %vm1412 = vcmp.eq.f32.partialorder %v1285, 0.0
          %v1413 = vand.u32 %v1285, 2147483648
          %v1414 = vsel %vm1412, %v1413, %v1411
          %v1415 = vrsqrt.pop %v1287
          %v1416 = vmul.f32 %v1287, %v1415
          %vm1417 = vcmp.eq.f32.partialorder %v1287, inf
          %v1418 = vsel %vm1417, %v1287, %v1416
          %vm1419 = vcmp.eq.f32.partialorder %v1287, 0.0
          %v1420 = vand.u32 %v1287, 2147483648
          %v1421 = vsel %vm1419, %v1420, %v1418
          %v1422 = vrsqrt.pop %v1289
          %v1423 = vmul.f32 %v1289, %v1422
          %vm1424 = vcmp.eq.f32.partialorder %v1289, inf
          %v1425 = vsel %vm1424, %v1289, %v1423
          %vm1426 = vcmp.eq.f32.partialorder %v1289, 0.0
          %v1427 = vand.u32 %v1289, 2147483648
          %v1428 = vsel %vm1426, %v1427, %v1425
          %v1429 = vrsqrt.pop %v1291
          %v1430 = vmul.f32 %v1291, %v1429
          %vm1431 = vcmp.eq.f32.partialorder %v1291, inf
          %v1432 = vsel %vm1431, %v1291, %v1430
          %vm1433 = vcmp.eq.f32.partialorder %v1291, 0.0
          %v1434 = vand.u32 %v1291, 2147483648
          %v1435 = vsel %vm1433, %v1434, %v1432
          %v1436 = vrsqrt.pop %v1293
          %v1437 = vmul.f32 %v1293, %v1436
          %vm1438 = vcmp.eq.f32.partialorder %v1293, inf
          %v1439 = vsel %vm1438, %v1293, %v1437
          %vm1440 = vcmp.eq.f32.partialorder %v1293, 0.0
          %v1441 = vand.u32 %v1293, 2147483648
          %v1442 = vsel %vm1440, %v1441, %v1439
          %v1443 = vrsqrt.pop %v1295
          %v1444 = vmul.f32 %v1295, %v1443
          %vm1445 = vcmp.eq.f32.partialorder %v1295, inf
          %v1446 = vsel %vm1445, %v1295, %v1444
          %vm1447 = vcmp.eq.f32.partialorder %v1295, 0.0
          %v1448 = vand.u32 %v1295, 2147483648
          %v1449 = vsel %vm1447, %v1448, %v1446
          %v1450 = vrsqrt.pop %v1297
          %v1451 = vmul.f32 %v1297, %v1450
          %vm1452 = vcmp.eq.f32.partialorder %v1297, inf
          %v1453 = vsel %vm1452, %v1297, %v1451
          %vm1454 = vcmp.eq.f32.partialorder %v1297, 0.0
          %v1455 = vand.u32 %v1297, 2147483648
          %v1456 = vsel %vm1454, %v1455, %v1453
          %v1457 = vrsqrt.pop %v1299
          %v1458 = vmul.f32 %v1299, %v1457
          %vm1459 = vcmp.eq.f32.partialorder %v1299, inf
          %v1460 = vsel %vm1459, %v1299, %v1458
          %vm1461 = vcmp.eq.f32.partialorder %v1299, 0.0
          %v1462 = vand.u32 %v1299, 2147483648
          %v1463 = vsel %vm1461, %v1462, %v1460
          %v1464 = vrsqrt.pop %v1301
          %v1465 = vmul.f32 %v1301, %v1464
          %vm1466 = vcmp.eq.f32.partialorder %v1301, inf
          %v1467 = vsel %vm1466, %v1301, %v1465
          %vm1468 = vcmp.eq.f32.partialorder %v1301, 0.0
          %v1469 = vand.u32 %v1301, 2147483648
          %v1470 = vsel %vm1468, %v1469, %v1467
          %v1471 = vrsqrt.pop %v1303
          %v1472 = vmul.f32 %v1303, %v1471
          %vm1473 = vcmp.eq.f32.partialorder %v1303, inf
          %v1474 = vsel %vm1473, %v1303, %v1472
          %vm1475 = vcmp.eq.f32.partialorder %v1303, 0.0
          %v1476 = vand.u32 %v1303, 2147483648
          %v1477 = vsel %vm1475, %v1476, %v1474
          %v1478 = vrsqrt.pop %v1305
          %v1479 = vmul.f32 %v1305, %v1478
          %vm1480 = vcmp.eq.f32.partialorder %v1305, inf
          %v1481 = vsel %vm1480, %v1305, %v1479
          %vm1482 = vcmp.eq.f32.partialorder %v1305, 0.0
          %v1483 = vand.u32 %v1305, 2147483648
          %v1484 = vsel %vm1482, %v1483, %v1481
          %v1485 = vrsqrt.pop %v1307
          %v1486 = vmul.f32 %v1307, %v1485
          %vm1487 = vcmp.eq.f32.partialorder %v1307, inf
          %v1488 = vsel %vm1487, %v1307, %v1486
          %vm1489 = vcmp.eq.f32.partialorder %v1307, 0.0
          %v1490 = vand.u32 %v1307, 2147483648
          %v1491 = vsel %vm1489, %v1490, %v1488
          %v1492 = vrsqrt.pop %v1309
          %v1493 = vmul.f32 %v1309, %v1492
          %vm1494 = vcmp.eq.f32.partialorder %v1309, inf
          %v1495 = vsel %vm1494, %v1309, %v1493
          %vm1496 = vcmp.eq.f32.partialorder %v1309, 0.0
          %v1497 = vand.u32 %v1309, 2147483648
          %v1498 = vsel %vm1496, %v1497, %v1495
          %v1499 = vrsqrt.pop %v1311
          %v1500 = vmul.f32 %v1311, %v1499
          %vm1501 = vcmp.eq.f32.partialorder %v1311, inf
          %v1502 = vsel %vm1501, %v1311, %v1500
          %vm1503 = vcmp.eq.f32.partialorder %v1311, 0.0
          %v1504 = vand.u32 %v1311, 2147483648
          %v1505 = vsel %vm1503, %v1504, %v1502
          %v1506 = vrsqrt.pop %v1313
          %v1507 = vmul.f32 %v1313, %v1506
          %vm1508 = vcmp.eq.f32.partialorder %v1313, inf
          %v1509 = vsel %vm1508, %v1313, %v1507
          %vm1510 = vcmp.eq.f32.partialorder %v1313, 0.0
          %v1511 = vand.u32 %v1313, 2147483648
          %v1512 = vsel %vm1510, %v1511, %v1509
          %v1513 = vrsqrt.pop %v1315
          %v1514 = vmul.f32 %v1315, %v1513
          %vm1515 = vcmp.eq.f32.partialorder %v1315, inf
          %v1516 = vsel %vm1515, %v1315, %v1514
          %vm1517 = vcmp.eq.f32.partialorder %v1315, 0.0
          %v1518 = vand.u32 %v1315, 2147483648
          %v1519 = vsel %vm1517, %v1518, %v1516
          %v1520 = vrsqrt.pop %v1317
          %v1521 = vmul.f32 %v1317, %v1520
          %vm1522 = vcmp.eq.f32.partialorder %v1317, inf
          %v1523 = vsel %vm1522, %v1317, %v1521
          %vm1524 = vcmp.eq.f32.partialorder %v1317, 0.0
          %v1525 = vand.u32 %v1317, 2147483648
          %v1526 = vsel %vm1524, %v1525, %v1523
          %v1527 = vrsqrt.pop %v1319
          %v1528 = vmul.f32 %v1319, %v1527
          %vm1529 = vcmp.eq.f32.partialorder %v1319, inf
          %v1530 = vsel %vm1529, %v1319, %v1528
          %vm1531 = vcmp.eq.f32.partialorder %v1319, 0.0
          %v1532 = vand.u32 %v1319, 2147483648
          %v1533 = vsel %vm1531, %v1532, %v1530
          %v1534 = vrsqrt.pop %v1321
          %v1535 = vmul.f32 %v1321, %v1534
          %vm1536 = vcmp.eq.f32.partialorder %v1321, inf
          %v1537 = vsel %vm1536, %v1321, %v1535
          %vm1538 = vcmp.eq.f32.partialorder %v1321, 0.0
          %v1539 = vand.u32 %v1321, 2147483648
          %v1540 = vsel %vm1538, %v1539, %v1537
          %v1541 = vrsqrt.pop %v1323
          %v1542 = vmul.f32 %v1323, %v1541
          %vm1543 = vcmp.eq.f32.partialorder %v1323, inf
          %v1544 = vsel %vm1543, %v1323, %v1542
          %vm1545 = vcmp.eq.f32.partialorder %v1323, 0.0
          %v1546 = vand.u32 %v1323, 2147483648
          %v1547 = vsel %vm1545, %v1546, %v1544
          %v1548 = vld [vmem:[#allocation3] sm:$0xff]
          %v1549 = vld [vmem:[#allocation3 + $0x8] sm:$0xff]
          %v1550 = vld [vmem:[#allocation3 + $0x10] sm:$0xff]
          %v1551 = vld [vmem:[#allocation3 + $0x18] sm:$0xff]
          %v1552 = vld [vmem:[#allocation3 + $0x20] sm:$0xff]
          %v1553 = vld [vmem:[#allocation3 + $0x28] sm:$0xff]
          %v1554 = vld [vmem:[#allocation3 + $0x30] sm:$0xff]
          %v1555 = vld [vmem:[#allocation3 + $0x38] sm:$0xff]
          %v1556 = vld [vmem:[#allocation3 + $0x40] sm:$0xff]
          %v1557 = vld [vmem:[#allocation3 + $0x48] sm:$0xff]
          %v1558 = vld [vmem:[#allocation3 + $0x50] sm:$0xff]
          %v1559 = vld [vmem:[#allocation3 + $0x58] sm:$0xff]
          %v1560 = vld [vmem:[#allocation3 + $0x60] sm:$0xff]
          %v1561 = vld [vmem:[#allocation3 + $0x68] sm:$0xff]
          %v1562 = vld [vmem:[#allocation3 + $0x70] sm:$0xff]
          %v1563 = vld [vmem:[#allocation3 + $0x78] sm:$0xff]
          %v1564 = vld [vmem:[#allocation3 + $0x80] sm:$0xff]
          %v1565 = vld [vmem:[#allocation3 + $0x88] sm:$0xff]
          %v1566 = vld [vmem:[#allocation3 + $0x90] sm:$0xff]
          %v1567 = vld [vmem:[#allocation3 + $0x98] sm:$0xff]
          %v1568 = vld [vmem:[#allocation3 + $0xa0] sm:$0xff]
          %v1569 = vld [vmem:[#allocation3 + $0xa8] sm:$0xff]
          %v1570 = vld [vmem:[#allocation3 + $0xb0] sm:$0xff]
          %v1571 = vld [vmem:[#allocation3 + $0xb8] sm:$0xff]
          %v1572 = vld [vmem:[#allocation3 + $0xc0] sm:$0xff]
          %v1573 = vld [vmem:[#allocation3 + $0xc8] sm:$0xff]
          %v1574 = vld [vmem:[#allocation3 + $0xd0] sm:$0xff]
          %v1575 = vld [vmem:[#allocation3 + $0xd8] sm:$0xff]
          %v1576 = vld [vmem:[#allocation3 + $0xe0] sm:$0xff]
          %v1577 = vld [vmem:[#allocation3 + $0xe8] sm:$0xff]
          %v1578 = vld [vmem:[#allocation3 + $0xf0] sm:$0xff]
          %v1579 = vld [vmem:[#allocation3 + $0xf8] sm:$0xff]
          %v1580 = vmul.f32 %v1548, 2.0
          %v1581 = vmul.f32 %v1549, 2.0
          %v1582 = vmul.f32 %v1550, 2.0
          %v1583 = vmul.f32 %v1551, 2.0
          %v1584 = vmul.f32 %v1552, 2.0
          %v1585 = vmul.f32 %v1553, 2.0
          %v1586 = vmul.f32 %v1554, 2.0
          %v1587 = vmul.f32 %v1555, 2.0
          %v1588 = vmul.f32 %v1556, 2.0
          %v1589 = vmul.f32 %v1557, 2.0
          %v1590 = vmul.f32 %v1558, 2.0
          %v1591 = vmul.f32 %v1559, 2.0
          %v1592 = vmul.f32 %v1560, 2.0
          %v1593 = vmul.f32 %v1561, 2.0
          %v1594 = vmul.f32 %v1562, 2.0
          %v1595 = vmul.f32 %v1563, 2.0
          %v1596 = vmul.f32 %v1564, 2.0
          %v1597 = vmul.f32 %v1565, 2.0
          %v1598 = vmul.f32 %v1566, 2.0
          %v1599 = vmul.f32 %v1567, 2.0
          %v1600 = vmul.f32 %v1568, 2.0
          %v1601 = vmul.f32 %v1569, 2.0
          %v1602 = vmul.f32 %v1570, 2.0
          %v1603 = vmul.f32 %v1571, 2.0
          %v1604 = vmul.f32 %v1572, 2.0
          %v1605 = vmul.f32 %v1573, 2.0
          %v1606 = vmul.f32 %v1574, 2.0
          %v1607 = vmul.f32 %v1575, 2.0
          %v1608 = vmul.f32 %v1576, 2.0
          %v1609 = vmul.f32 %v1577, 2.0
          %v1610 = vmul.f32 %v1578, 2.0
          %v1611 = vmul.f32 %v1579, 2.0
          %v1612 = vadd.f32 %v1580, %v1330
          %v1613 = vadd.f32 %v1581, %v1337
          %v1614 = vadd.f32 %v1582, %v1344
          %v1615 = vadd.f32 %v1583, %v1351
          %v1616 = vadd.f32 %v1584, %v1358
          %v1617 = vadd.f32 %v1585, %v1365
          %v1618 = vadd.f32 %v1586, %v1372
          %v1619 = vadd.f32 %v1587, %v1379
          %v1620 = vadd.f32 %v1588, %v1386
          %v1621 = vadd.f32 %v1589, %v1393
          %v1622 = vadd.f32 %v1590, %v1400
          %v1623 = vadd.f32 %v1591, %v1407
          %v1624 = vadd.f32 %v1592, %v1414
          %v1625 = vadd.f32 %v1593, %v1421
          %v1626 = vadd.f32 %v1594, %v1428
          %v1627 = vadd.f32 %v1595, %v1435
          %v1628 = vadd.f32 %v1596, %v1442
          %v1629 = vadd.f32 %v1597, %v1449
          %v1630 = vadd.f32 %v1598, %v1456
          %v1631 = vadd.f32 %v1599, %v1463
          %v1632 = vadd.f32 %v1600, %v1470
          %v1633 = vadd.f32 %v1601, %v1477
          %v1634 = vadd.f32 %v1602, %v1484
          %v1635 = vadd.f32 %v1603, %v1491
          %v1636 = vadd.f32 %v1604, %v1498
          %v1637 = vadd.f32 %v1605, %v1505
          %v1638 = vadd.f32 %v1606, %v1512
          %v1639 = vadd.f32 %v1607, %v1519
          %v1640 = vadd.f32 %v1608, %v1526
          %v1641 = vadd.f32 %v1609, %v1533
          %v1642 = vadd.f32 %v1610, %v1540
          %v1643 = vadd.f32 %v1611, %v1547
          %1645 = vset.pattern.permute.xlu0 0
          %1646 = vperm.xlu0 %1645, %v1612
          %v1647 = vpop.permute.xlu0 %1646
          %1650 = vset.pattern.permute.xlu0 0
          %1651 = vperm.xlu0 %1650, %v1613
          %v1652 = vpop.permute.xlu0 %1651
          %1655 = vset.pattern.permute.xlu0 0
          %1656 = vperm.xlu0 %1655, %v1614
          %v1657 = vpop.permute.xlu0 %1656
          %1660 = vset.pattern.permute.xlu0 0
          %1661 = vperm.xlu0 %1660, %v1615
          %v1662 = vpop.permute.xlu0 %1661
          %1665 = vset.pattern.permute.xlu0 0
          %1666 = vperm.xlu0 %1665, %v1616
          %v1667 = vpop.permute.xlu0 %1666
          %1670 = vset.pattern.permute.xlu0 0
          %1671 = vperm.xlu0 %1670, %v1617
          %v1672 = vpop.permute.xlu0 %1671
          %1675 = vset.pattern.permute.xlu0 0
          %1676 = vperm.xlu0 %1675, %v1618
          %v1677 = vpop.permute.xlu0 %1676
          %1680 = vset.pattern.permute.xlu0 0
          %1681 = vperm.xlu0 %1680, %v1619
          %v1682 = vpop.permute.xlu0 %1681
          %1685 = vset.pattern.permute.xlu0 0
          %1686 = vperm.xlu0 %1685, %v1620
          %v1687 = vpop.permute.xlu0 %1686
          %1690 = vset.pattern.permute.xlu0 0
          %1691 = vperm.xlu0 %1690, %v1621
          %v1692 = vpop.permute.xlu0 %1691
          %1695 = vset.pattern.permute.xlu0 0
          %1696 = vperm.xlu0 %1695, %v1622
          %v1697 = vpop.permute.xlu0 %1696
          %1700 = vset.pattern.permute.xlu0 0
          %1701 = vperm.xlu0 %1700, %v1623
          %v1702 = vpop.permute.xlu0 %1701
          %1705 = vset.pattern.permute.xlu0 0
          %1706 = vperm.xlu0 %1705, %v1624
          %v1707 = vpop.permute.xlu0 %1706
          %1710 = vset.pattern.permute.xlu0 0
          %1711 = vperm.xlu0 %1710, %v1625
          %v1712 = vpop.permute.xlu0 %1711
          %1715 = vset.pattern.permute.xlu0 0
          %1716 = vperm.xlu0 %1715, %v1626
          %v1717 = vpop.permute.xlu0 %1716
          %1720 = vset.pattern.permute.xlu0 0
          %1721 = vperm.xlu0 %1720, %v1627
          %v1722 = vpop.permute.xlu0 %1721
          %1725 = vset.pattern.permute.xlu0 0
          %1726 = vperm.xlu0 %1725, %v1628
          %v1727 = vpop.permute.xlu0 %1726
          %1730 = vset.pattern.permute.xlu0 0
          %1731 = vperm.xlu0 %1730, %v1629
          %v1732 = vpop.permute.xlu0 %1731
          %1735 = vset.pattern.permute.xlu0 0
          %1736 = vperm.xlu0 %1735, %v1630
          %v1737 = vpop.permute.xlu0 %1736
          %1740 = vset.pattern.permute.xlu0 0
          %1741 = vperm.xlu0 %1740, %v1631
          %v1742 = vpop.permute.xlu0 %1741
          %1745 = vset.pattern.permute.xlu0 0
          %1746 = vperm.xlu0 %1745, %v1632
          %v1747 = vpop.permute.xlu0 %1746
          %1750 = vset.pattern.permute.xlu0 0
          %1751 = vperm.xlu0 %1750, %v1633
          %v1752 = vpop.permute.xlu0 %1751
          %1755 = vset.pattern.permute.xlu0 0
          %1756 = vperm.xlu0 %1755, %v1634
          %v1757 = vpop.permute.xlu0 %1756
          %1760 = vset.pattern.permute.xlu0 0
          %1761 = vperm.xlu0 %1760, %v1635
          %v1762 = vpop.permute.xlu0 %1761
          %1765 = vset.pattern.permute.xlu0 0
          %1766 = vperm.xlu0 %1765, %v1636
          %v1767 = vpop.permute.xlu0 %1766
          %1770 = vset.pattern.permute.xlu0 0
          %1771 = vperm.xlu0 %1770, %v1637
          %v1772 = vpop.permute.xlu0 %1771
          %1775 = vset.pattern.permute.xlu0 0
          %1776 = vperm.xlu0 %1775, %v1638
          %v1777 = vpop.permute.xlu0 %1776
          %1780 = vset.pattern.permute.xlu0 0
          %1781 = vperm.xlu0 %1780, %v1639
          %v1782 = vpop.permute.xlu0 %1781
          %1785 = vset.pattern.permute.xlu0 0
          %1786 = vperm.xlu0 %1785, %v1640
          %v1787 = vpop.permute.xlu0 %1786
          %1790 = vset.pattern.permute.xlu0 0
          %1791 = vperm.xlu0 %1790, %v1641
          %v1792 = vpop.permute.xlu0 %1791
          %1795 = vset.pattern.permute.xlu0 0
          %1796 = vperm.xlu0 %1795, %v1642
          %v1797 = vpop.permute.xlu0 %1796
          %1800 = vset.pattern.permute.xlu0 0
          %1801 = vperm.xlu0 %1800, %v1643
          %v1802 = vpop.permute.xlu0 %1801
          %v1804 = vmul.f32 %v1647, %v1196
          %v1805 = vmul.f32 %v1652, %v1197
          %v1806 = vmul.f32 %v1657, %v1198
          %v1807 = vmul.f32 %v1662, %v1199
          %v1808 = vmul.f32 %v1667, %v1200
          %v1809 = vmul.f32 %v1672, %v1201
          %v1810 = vmul.f32 %v1677, %v1202
          %v1811 = vmul.f32 %v1682, %v1203
          %v1812 = vmul.f32 %v1687, %v1204
          %v1813 = vmul.f32 %v1692, %v1205
          %v1814 = vmul.f32 %v1697, %v1206
          %v1815 = vmul.f32 %v1702, %v1207
          %v1816 = vmul.f32 %v1707, %v1208
          %v1817 = vmul.f32 %v1712, %v1209
          %v1818 = vmul.f32 %v1717, %v1210
          %v1819 = vmul.f32 %v1722, %v1211
          %v1820 = vmul.f32 %v1727, %v1212
          %v1821 = vmul.f32 %v1732, %v1213
          %v1822 = vmul.f32 %v1737, %v1214
          %v1823 = vmul.f32 %v1742, %v1215
          %v1824 = vmul.f32 %v1747, %v1216
          %v1825 = vmul.f32 %v1752, %v1217
          %v1826 = vmul.f32 %v1757, %v1218
          %v1827 = vmul.f32 %v1762, %v1219
          %v1828 = vmul.f32 %v1767, %v1220
          %v1829 = vmul.f32 %v1772, %v1221
          %v1830 = vmul.f32 %v1777, %v1222
          %v1831 = vmul.f32 %v1782, %v1223
          %v1832 = vmul.f32 %v1787, %v1224
          %v1833 = vmul.f32 %v1792, %v1225
          %v1834 = vmul.f32 %v1797, %v1226
          %v1835 = vmul.f32 %v1802, %v1227
          %v1836 = vld [vmem:[#allocation2] sm:$0xff]
          %v1837 = vld [vmem:[#allocation2 + $0x8] sm:$0xff]
          %v1838 = vld [vmem:[#allocation2 + $0x10] sm:$0xff]
          %v1839 = vld [vmem:[#allocation2 + $0x18] sm:$0xff]
          %v1840 = vld [vmem:[#allocation2 + $0x20] sm:$0xff]
          %v1841 = vld [vmem:[#allocation2 + $0x28] sm:$0xff]
          %v1842 = vld [vmem:[#allocation2 + $0x30] sm:$0xff]
          %v1843 = vld [vmem:[#allocation2 + $0x38] sm:$0xff]
          %v1844 = vld [vmem:[#allocation2 + $0x40] sm:$0xff]
          %v1845 = vld [vmem:[#allocation2 + $0x48] sm:$0xff]
          %v1846 = vld [vmem:[#allocation2 + $0x50] sm:$0xff]
          %v1847 = vld [vmem:[#allocation2 + $0x58] sm:$0xff]
          %v1848 = vld [vmem:[#allocation2 + $0x60] sm:$0xff]
          %v1849 = vld [vmem:[#allocation2 + $0x68] sm:$0xff]
          %v1850 = vld [vmem:[#allocation2 + $0x70] sm:$0xff]
          %v1851 = vld [vmem:[#allocation2 + $0x78] sm:$0xff]
          %v1852 = vld [vmem:[#allocation2 + $0x80] sm:$0xff]
          %v1853 = vld [vmem:[#allocation2 + $0x88] sm:$0xff]
          %v1854 = vld [vmem:[#allocation2 + $0x90] sm:$0xff]
          %v1855 = vld [vmem:[#allocation2 + $0x98] sm:$0xff]
          %v1856 = vld [vmem:[#allocation2 + $0xa0] sm:$0xff]
          %v1857 = vld [vmem:[#allocation2 + $0xa8] sm:$0xff]
          %v1858 = vld [vmem:[#allocation2 + $0xb0] sm:$0xff]
          %v1859 = vld [vmem:[#allocation2 + $0xb8] sm:$0xff]
          %v1860 = vld [vmem:[#allocation2 + $0xc0] sm:$0xff]
          %v1861 = vld [vmem:[#allocation2 + $0xc8] sm:$0xff]
          %v1862 = vld [vmem:[#allocation2 + $0xd0] sm:$0xff]
          %v1863 = vld [vmem:[#allocation2 + $0xd8] sm:$0xff]
          %v1864 = vld [vmem:[#allocation2 + $0xe0] sm:$0xff]
          %v1865 = vld [vmem:[#allocation2 + $0xe8] sm:$0xff]
          %v1866 = vld [vmem:[#allocation2 + $0xf0] sm:$0xff]
          %v1867 = vld [vmem:[#allocation2 + $0xf8] sm:$0xff]
          %v1868 = vmul.f32 %v1836, 2.0
          %v1869 = vmul.f32 %v1837, 2.0
          %v1870 = vmul.f32 %v1838, 2.0
          %v1871 = vmul.f32 %v1839, 2.0
          %v1872 = vmul.f32 %v1840, 2.0
          %v1873 = vmul.f32 %v1841, 2.0
          %v1874 = vmul.f32 %v1842, 2.0
          %v1875 = vmul.f32 %v1843, 2.0
          %v1876 = vmul.f32 %v1844, 2.0
          %v1877 = vmul.f32 %v1845, 2.0
          %v1878 = vmul.f32 %v1846, 2.0
          %v1879 = vmul.f32 %v1847, 2.0
          %v1880 = vmul.f32 %v1848, 2.0
          %v1881 = vmul.f32 %v1849, 2.0
          %v1882 = vmul.f32 %v1850, 2.0
          %v1883 = vmul.f32 %v1851, 2.0
          %v1884 = vmul.f32 %v1852, 2.0
          %v1885 = vmul.f32 %v1853, 2.0
          %v1886 = vmul.f32 %v1854, 2.0
          %v1887 = vmul.f32 %v1855, 2.0
          %v1888 = vmul.f32 %v1856, 2.0
          %v1889 = vmul.f32 %v1857, 2.0
          %v1890 = vmul.f32 %v1858, 2.0
          %v1891 = vmul.f32 %v1859, 2.0
          %v1892 = vmul.f32 %v1860, 2.0
          %v1893 = vmul.f32 %v1861, 2.0
          %v1894 = vmul.f32 %v1862, 2.0
          %v1895 = vmul.f32 %v1863, 2.0
          %v1896 = vmul.f32 %v1864, 2.0
          %v1897 = vmul.f32 %v1865, 2.0
          %v1898 = vmul.f32 %v1866, 2.0
          %v1899 = vmul.f32 %v1867, 2.0
          %v1900 = vsub.f32 %v1804, %v1868
          %v1901 = vsub.f32 %v1805, %v1869
          %v1902 = vsub.f32 %v1806, %v1870
          %v1903 = vsub.f32 %v1807, %v1871
          %v1904 = vsub.f32 %v1808, %v1872
          %v1905 = vsub.f32 %v1809, %v1873
          %v1906 = vsub.f32 %v1810, %v1874
          %v1907 = vsub.f32 %v1811, %v1875
          %v1908 = vsub.f32 %v1812, %v1876
          %v1909 = vsub.f32 %v1813, %v1877
          %v1910 = vsub.f32 %v1814, %v1878
          %v1911 = vsub.f32 %v1815, %v1879
          %v1912 = vsub.f32 %v1816, %v1880
          %v1913 = vsub.f32 %v1817, %v1881
          %v1914 = vsub.f32 %v1818, %v1882
          %v1915 = vsub.f32 %v1819, %v1883
          %v1916 = vsub.f32 %v1820, %v1884
          %v1917 = vsub.f32 %v1821, %v1885
          %v1918 = vsub.f32 %v1822, %v1886
          %v1919 = vsub.f32 %v1823, %v1887
          %v1920 = vsub.f32 %v1824, %v1888
          %v1921 = vsub.f32 %v1825, %v1889
          %v1922 = vsub.f32 %v1826, %v1890
          %v1923 = vsub.f32 %v1827, %v1891
          %v1924 = vsub.f32 %v1828, %v1892
          %v1925 = vsub.f32 %v1829, %v1893
          %v1926 = vsub.f32 %v1830, %v1894
          %v1927 = vsub.f32 %v1831, %v1895
          %v1928 = vsub.f32 %v1832, %v1896
          %v1929 = vsub.f32 %v1833, %v1897
          %v1930 = vsub.f32 %v1834, %v1898
          %v1931 = vsub.f32 %v1835, %v1899
          %1932 = vst [vmem:[%s282] sm:$0xff] %v1900
          %1933 = vst [vmem:[%s282 + $0x8] sm:$0xff] %v1901
          %1934 = vst [vmem:[%s282 + $0x10] sm:$0xff] %v1902
          %1935 = vst [vmem:[%s282 + $0x18] sm:$0xff] %v1903
          %1936 = vst [vmem:[%s282 + $0x20] sm:$0xff] %v1904
          %1937 = vst [vmem:[%s282 + $0x28] sm:$0xff] %v1905
          %1938 = vst [vmem:[%s282 + $0x30] sm:$0xff] %v1906
          %1939 = vst [vmem:[%s282 + $0x38] sm:$0xff] %v1907
          %1940 = vst [vmem:[%s282 + $0x40] sm:$0xff] %v1908
          %1941 = vst [vmem:[%s282 + $0x48] sm:$0xff] %v1909
          %1942 = vst [vmem:[%s282 + $0x50] sm:$0xff] %v1910
          %1943 = vst [vmem:[%s282 + $0x58] sm:$0xff] %v1911
          %1944 = vst [vmem:[%s282 + $0x60] sm:$0xff] %v1912
          %1945 = vst [vmem:[%s282 + $0x68] sm:$0xff] %v1913
          %1946 = vst [vmem:[%s282 + $0x70] sm:$0xff] %v1914
          %1947 = vst [vmem:[%s282 + $0x78] sm:$0xff] %v1915
          %1948 = vst [vmem:[%s282 + $0x80] sm:$0xff] %v1916
          %1949 = vst [vmem:[%s282 + $0x88] sm:$0xff] %v1917
          %1950 = vst [vmem:[%s282 + $0x90] sm:$0xff] %v1918
          %1951 = vst [vmem:[%s282 + $0x98] sm:$0xff] %v1919
          %1952 = vst [vmem:[%s282 + $0xa0] sm:$0xff] %v1920
          %1953 = vst [vmem:[%s282 + $0xa8] sm:$0xff] %v1921
          %1954 = vst [vmem:[%s282 + $0xb0] sm:$0xff] %v1922
          %1955 = vst [vmem:[%s282 + $0xb8] sm:$0xff] %v1923
          %1956 = vst [vmem:[%s282 + $0xc0] sm:$0xff] %v1924
          %1957 = vst [vmem:[%s282 + $0xc8] sm:$0xff] %v1925
          %1958 = vst [vmem:[%s282 + $0xd0] sm:$0xff] %v1926
          %1959 = vst [vmem:[%s282 + $0xd8] sm:$0xff] %v1927
          %1960 = vst [vmem:[%s282 + $0xe0] sm:$0xff] %v1928
          %1961 = vst [vmem:[%s282 + $0xe8] sm:$0xff] %v1929
          %1962 = vst [vmem:[%s282 + $0xf0] sm:$0xff] %v1930
          %1963 = vst [vmem:[%s282 + $0xf8] sm:$0xff] %v1931
        $region52: #{tpu_custom_call.1} parent=31 // pred_fallthru
          _
        %s1964 = sand.u32 %s123, 1
        %s1965 = scalar_lea.sflag [#allocation6], %s1964
        %s1966 = sand.u32 %s123, 1
        %s1967 = smul.addr %s1966, 256
        %s1968 = scalar_lea.vmem [#allocation10], %s1967
        // Predicated region
        $region53: #{tpu_custom_call.1} parent=31 // pred_check
          %p1969 = pneg %p133
        $region54: #{tpu_custom_call.1} parent=31 // pred_check_branch
          %1971 = sbr.rel (%p1969) target = $region56
        $region55: #{tpu_custom_call.1} parent=31 // pred_region
          %s1972 = smul.u32 32, %s27
          %s1974 = ssub.s32 4096, 4096
          %1975 = vsyncadd %s1965, %s1974
          %s1976 = smul.addr %s1972, 128
          %s1977 = scalar_lea.hbm %s3, %s1976
          %s1978 = sshll.u32 %s1968, 4
          %s1979 = int_to_ptr.vmem [resolvable:$true] %s1978
          %1984 = dma.vmem_to_hbm [thread:$0]  %s1979, 4096, %s1977, %s1965, 128, 128, 8
        $region56: #{tpu_custom_call.1} parent=31 // pred_fallthru
          _
      $region32: #{tpu_custom_call.1} parent=5 // pred_fallthru
        _
      %p1985 = scmp.le.s32.totalorder 2, %s18
      // Predicated region
      $region57: #{tpu_custom_call.1} parent=5 // pred_check
        %p1986 = pneg %p1985
      $region58: #{tpu_custom_call.1} parent=5 // pred_check_branch
        %1988 = sbr.rel (%p1986) target = $region60
      $region59: #{tpu_custom_call.1} parent=5 // pred_region
        %s1989 = ssub.s32 %s18, 2
        // Predicated region
        $region61: #{tpu_custom_call.1} parent=59 // pred_check
          %p1990 = pneg %p139
        $region62: #{tpu_custom_call.1} parent=59 // pred_check_branch
          %1992 = sbr.rel (%p1990) target = $region64
        $region63: #{tpu_custom_call.1} parent=59 // pred_region
          %s1993 = sand.u32 %s124, 1
          %s1994 = scalar_lea.sflag [#allocation6], %s1993
          %s1995 = sand.u32 %s124, 1
          %s1996 = smul.addr %s1995, 256
          %s1997 = scalar_lea.vmem [#allocation10], %s1996
          %1998 = dma.done %s1994, 4096
        $region64: #{tpu_custom_call.1} parent=59 // pred_fallthru
          _
      $region60: #{tpu_custom_call.1} parent=5 // pred_fallthru
        _
    $region6: #{tpu_custom_call.1} parent=1 // loop_footer
      %s22 = sadd.s32 1, %s18
    $region7: #{tpu_custom_call.1} parent=1 // loop_footer_branch
      %17 = sbr.rel target = $region3
    $region8: #{tpu_custom_call.1} parent=1 // loop_exit
      _
    %1999 = vsyncpa [#allocation5], 1
    %s2000 = scalar_lea.sflag [#allocation5], 1
    %2001 = vsyncpa %s2000, 1
    %2002 = vsyncpa [#allocation8], 1
    %s2003 = scalar_lea.sflag [#allocation8], 1
    %2004 = vsyncpa %s2003, 1
    %2005 = vsyncpa [#allocation6], 1
    %s2006 = scalar_lea.sflag [#allocation6], 1
    %2007 = vsyncpa %s2006, 1

</llo_original>
